<compile_context>
chip_gen: v7x
topology: tpu7x:2x2x1
jax: 0.10.0
libtpu: 0.0.40
codegen_flags: <defaults>
</compile_context>

<pallas_src>
import math

import jax
import jax.numpy as jnp
from jax import lax
from jax.experimental import pallas as pl
from jax.experimental.pallas import tpu as pltpu  # noqa: F401  (kept for TPU backend import)

# ---------------------------------------------------------------------------
# Model hyper-parameters (small, consistent with the module's __init__)
# ---------------------------------------------------------------------------
BATCH = 2
NUM_FRAMES = 8            # max_frames
VIDEO_SIZE = 32
AUDIO_SIZE = 16
FEATURE_SIZE = VIDEO_SIZE + AUDIO_SIZE              # 48
CLUSTER_SIZE = 8
AUDIO_CLUSTER = CLUSTER_SIZE // 2                    # 4
NCLUST = CLUSTER_SIZE + AUDIO_CLUSTER                # 12
HIDDEN_SIZE = 32
VOCAB_SIZE = 16
MOE_MIXTURES = 2
FV_COUPLING_FACTOR = 0.01
BN_EPS = 1e-5
DV = VIDEO_SIZE * CLUSTER_SIZE                       # 256
DA = AUDIO_SIZE * AUDIO_CLUSTER                      # 64
FV_DIM = 2 * (DV + DA)                               # 640
MOE_PAD = 128                                        # lane-aligned vocab blocks
MOE_NBLK = (MOE_MIXTURES + 1) + MOE_MIXTURES         # 3 gate + 2 expert = 5
MOE_W = MOE_NBLK * MOE_PAD                           # 640
VEC_W = max(FEATURE_SIZE, NCLUST, HIDDEN_SIZE, MOE_W)  # 640  (packed vector row width)


# ---------------------------------------------------------------------------
# Fused kernel: input-BN + (video & audio) NetFV + hidden1/gating + MoE head
# ---------------------------------------------------------------------------
def fused_kernel(x_ref, vec_ref, cwf_ref, fvc_v_ref, fvc_a_ref,
                 w1v_ref, w1a_ref, wg_ref, wmoe_ref, out_ref):
    B, T, F = x_ref.shape

    # folded input batch-norm (inference-mode affine)
    x = x_ref[...] * vec_ref[0:1, 0:F] + vec_ref[1:2, 0:F]              # [B, T, 48]

    # fused block-diagonal video+audio cluster matmul (cluster-BN scale pre-folded)
    act = jnp.dot(x.reshape(B * T, F), cwf_ref[...],
                  preferred_element_type=jnp.float32)                   # [BT, 12]
    act = act + vec_ref[2:3, 0:NCLUST]

    def softmax_lanes(a):
        a = a - jnp.max(a, axis=-1, keepdims=True)
        e = jnp.exp(a)
        return e * pl.reciprocal(jnp.sum(e, axis=-1, keepdims=True), approx=True)

    act_v = softmax_lanes(act[:, 0:CLUSTER_SIZE]).reshape(B, T, CLUSTER_SIZE)
    act_a = softmax_lanes(act[:, CLUSTER_SIZE:NCLUST]).reshape(B, T, AUDIO_CLUSTER)

    def fisher(xm, act3, fvc_ref):
        """One NetFV tower.  fv kept in [B, Cm, Fm] (features on the lane axis)."""
        Cm = act3.shape[2]
        Fm = xm.shape[2]
        cw2 = fvc_ref[0]          # 0.01 * cluster_weights, transposed to [Cm, Fm]
        cw2sq = fvc_ref[1]        # cw2^2
        inv2 = fvc_ref[2]         # 1 / (covar^2 + 1e-6)
        inv4 = fvc_ref[3]         # inv2^2

        # three tiny batched matmuls sharing act3 (MXU is otherwise idle);
        # the ones-einsum yields a_sum already broadcast over the feature axis.
        fv1 = jnp.einsum("btc,btf->bcf", act3, xm,
                         preferred_element_type=jnp.float32)            # [B, Cm, Fm]
        fv2 = jnp.einsum("btc,btf->bcf", act3, xm * xm,
                         preferred_element_type=jnp.float32)
        asum = jnp.einsum("btc,btf->bcf", act3, jnp.ones_like(xm),
                          preferred_element_type=jnp.float32)

        # second-order Fisher component (reference divides by (covar^2+1e-6)^2)
        fv2 = (asum * cw2sq + fv2 - 2.0 * fv1 * cw2) * inv4 - asum
        s2 = jnp.sum(jnp.sum(fv2 * fv2, axis=-1, keepdims=True), axis=1, keepdims=True)
        fv2 = fv2 * lax.rsqrt(jnp.maximum(s2, 1e-24))                   # full-vector L2
        # the reference's second identical full-vector L2 of fv2 is a numerical no-op.

        # first-order Fisher component
        fv1 = (fv1 - asum * cw2) * inv2
        s1c = jnp.sum(fv1 * fv1, axis=-1, keepdims=True)                # per-cluster (over F)
        fv1 = fv1 * lax.rsqrt(jnp.maximum(s1c, 1e-24))
        s1 = jnp.sum(jnp.sum(fv1 * fv1, axis=-1, keepdims=True), axis=1, keepdims=True)
        fv1 = fv1 * lax.rsqrt(jnp.maximum(s1, 1e-24))                   # full-vector L2

        # flatten c*Fm+f; torch's f*Cm+c order is folded into the w1 block rows.
        return fv1.reshape(B, Cm * Fm), fv2.reshape(B, Cm * Fm)

    fv1v, fv2v = fisher(x[:, :, 0:VIDEO_SIZE], act_v, fvc_v_ref)
    fv1a, fv2a = fisher(x[:, :, VIDEO_SIZE:F], act_a, fvc_a_ref)

    # hidden1: each fv block contracted against its pre-permuted w1 block
    # (no fv concatenation / assembly buffer), BN scale already folded into w1.
    act1 = (jnp.dot(fv1v, w1v_ref[0], preferred_element_type=jnp.float32)
            + jnp.dot(fv2v, w1v_ref[1], preferred_element_type=jnp.float32)
            + jnp.dot(fv1a, w1a_ref[0], preferred_element_type=jnp.float32)
            + jnp.dot(fv2a, w1a_ref[1], preferred_element_type=jnp.float32)
            + vec_ref[3:4, 0:HIDDEN_SIZE])
    act1 = jnp.clip(act1, 0.0, 6.0)                                     # ReLU6

    # gating (BN scale folded into wg) + sigmoid (single tanh per sigmoid)
    gates = (jnp.dot(act1, wg_ref[...], preferred_element_type=jnp.float32)
             + vec_ref[4:5, 0:HIDDEN_SIZE])
    act1 = act1 * (0.5 * jnp.tanh(0.5 * gates) + 0.5)

    # MoE classifier: one matmul; every 16-wide vocab block starts at a 128-lane
    # boundary so the slices below are vreg-aligned.
    logits = (jnp.dot(act1, wmoe_ref[...], preferred_element_type=jnp.float32)
              + vec_ref[5:6, 0:MOE_W])
    g = [logits[:, m * MOE_PAD:m * MOE_PAD + VOCAB_SIZE]
         for m in range(MOE_MIXTURES + 1)]
    gmax = g[0]
    for m in range(1, MOE_MIXTURES + 1):
        gmax = jnp.maximum(gmax, g[m])
    ge = [jnp.exp(gi - gmax) for gi in g]
    denom = ge[0]
    for m in range(1, MOE_MIXTURES + 1):
        denom = denom + ge[m]

    prob = None
    off = (MOE_MIXTURES + 1) * MOE_PAD
    for m in range(MOE_MIXTURES):
        e = logits[:, off + m * MOE_PAD: off + m * MOE_PAD + VOCAB_SIZE]
        expert = 0.5 * jnp.tanh(0.5 * e) + 0.5                          # sigmoid
        contrib = ge[m] * expert
        prob = contrib if prob is None else prob + contrib
    out_ref[...] = prob * pl.reciprocal(denom, approx=True)             # [B, vocab]


# ---------------------------------------------------------------------------
# Wrapper: single pallas_call, whole problem resident in VMEM, no grid
# ---------------------------------------------------------------------------
def netfv_model_forward(x, fp):
    B = x.shape[0]
    return pl.pallas_call(
        fused_kernel,
        out_shape=jax.ShapeDtypeStruct((B, VOCAB_SIZE), jnp.float32),
    )(x, fp["vecs"], fp["cw_fused"], fp["fvconst_v"], fp["fvconst_a"],
      fp["w1_v"], fp["w1_a"], fp["wg_eff"], fp["w_moe"])


# ---------------------------------------------------------------------------
# Deterministic parameter init (matches create_Param std conventions)
# ---------------------------------------------------------------------------
def init_params(key):
    ks = jax.random.split(key, 8)
    bn_scale = 1.0 / math.sqrt(1.0 + BN_EPS)   # gamma=1, beta=0, mean=0, var=1

    p = {}
    p["in_scale"] = jnp.full((1, FEATURE_SIZE), bn_scale, jnp.float32)
    p["in_bias"] = jnp.zeros((1, FEATURE_SIZE), jnp.float32)

    p["cw_v"] = jax.random.normal(ks[0], (VIDEO_SIZE, CLUSTER_SIZE),
                                  jnp.float32) / math.sqrt(VIDEO_SIZE)
    p["covar_v"] = 1.0 + jax.random.normal(ks[1], (VIDEO_SIZE, CLUSTER_SIZE),
                                           jnp.float32) / math.sqrt(VIDEO_SIZE)
    p["cbn_s_v"] = jnp.full((1, CLUSTER_SIZE), bn_scale, jnp.float32)
    p["cbn_b_v"] = jnp.zeros((1, CLUSTER_SIZE), jnp.float32)

    p["cw_a"] = jax.random.normal(ks[2], (AUDIO_SIZE, AUDIO_CLUSTER),
                                  jnp.float32) / math.sqrt(AUDIO_SIZE)
    p["covar_a"] = 1.0 + jax.random.normal(ks[3], (AUDIO_SIZE, AUDIO_CLUSTER),
                                           jnp.float32) / math.sqrt(AUDIO_SIZE)
    p["cbn_s_a"] = jnp.full((1, AUDIO_CLUSTER), bn_scale, jnp.float32)
    p["cbn_b_a"] = jnp.zeros((1, AUDIO_CLUSTER), jnp.float32)

    p["w1"] = jax.random.normal(ks[4], (FV_DIM, HIDDEN_SIZE),
                                jnp.float32) / math.sqrt(CLUSTER_SIZE)
    p["bn1_s"] = jnp.full((1, HIDDEN_SIZE), bn_scale, jnp.float32)
    p["bn1_b"] = jnp.zeros((1, HIDDEN_SIZE), jnp.float32)

    p["wg"] = jax.random.normal(ks[5], (HIDDEN_SIZE, HIDDEN_SIZE),
                                jnp.float32) / math.sqrt(HIDDEN_SIZE)
    p["bng_s"] = jnp.full((1, HIDDEN_SIZE), bn_scale, jnp.float32)
    p["bng_b"] = jnp.zeros((1, HIDDEN_SIZE), jnp.float32)

    p["w_moe_gate"] = jax.random.normal(
        ks[6], (HIDDEN_SIZE, (MOE_MIXTURES + 1) * VOCAB_SIZE),
        jnp.float32) / math.sqrt(HIDDEN_SIZE)
    p["b_moe_gate"] = jnp.zeros((1, (MOE_MIXTURES + 1) * VOCAB_SIZE), jnp.float32)
    p["w_moe_exp"] = jax.random.normal(
        ks[7], (HIDDEN_SIZE, MOE_MIXTURES * VOCAB_SIZE),
        jnp.float32) / math.sqrt(HIDDEN_SIZE)
    p["b_moe_exp"] = jnp.zeros((1, MOE_MIXTURES * VOCAB_SIZE), jnp.float32)
    return p


def fold_params(p):
    """One-time (outside jit) parameter preparation: BN folding, constant
    precomputation, layout transposes, w1 block permutation, MoE lane padding,
    and packing of all 1-row vectors (cuts kernel operand count 17 -> 9)."""
    # block-diagonal cluster weights with cluster-BN scale folded in: [48, 12]
    cw_fused = jnp.zeros((FEATURE_SIZE, NCLUST), jnp.float32)
    cw_fused = cw_fused.at[:VIDEO_SIZE, :CLUSTER_SIZE].set(p["cw_v"] * p["cbn_s_v"])
    cw_fused = cw_fused.at[VIDEO_SIZE:, CLUSTER_SIZE:].set(p["cw_a"] * p["cbn_s_a"])

    def tower_consts(cw, covar):
        cw2 = (cw * FV_COUPLING_FACTOR).T                      # [Cm, Fm]
        inv2 = 1.0 / (covar * covar + 1e-6).T
        return jnp.stack([cw2, cw2 * cw2, inv2, inv2 * inv2], axis=0)   # [4, Cm, Fm]

    # hidden1 weights: BN scale folded, split into the four fv blocks and
    # row-permuted from torch's flatten order (f*Cm+c) to ours (c*Fm+f).
    w1 = p["w1"] * p["bn1_s"]

    def perm(block, Fm, Cm):
        return block.reshape(Fm, Cm, HIDDEN_SIZE).transpose(1, 0, 2).reshape(
            Cm * Fm, HIDDEN_SIZE)

    w1_v = jnp.stack([perm(w1[0:DV], VIDEO_SIZE, CLUSTER_SIZE),
                      perm(w1[DV:2 * DV], VIDEO_SIZE, CLUSTER_SIZE)], axis=0)
    w1_a = jnp.stack([perm(w1[2 * DV:2 * DV + DA], AUDIO_SIZE, AUDIO_CLUSTER),
                      perm(w1[2 * DV + DA:], AUDIO_SIZE, AUDIO_CLUSTER)], axis=0)

    # MoE weights: each 16-wide vocab block placed at a 128-lane boundary
    w_moe = jnp.zeros((HIDDEN_SIZE, MOE_W), jnp.float32)
    b_moe = jnp.zeros((MOE_W,), jnp.float32)
    for m in range(MOE_MIXTURES + 1):
        w_moe = w_moe.at[:, m * MOE_PAD:m * MOE_PAD + VOCAB_SIZE].set(
            p["w_moe_gate"][:, m * VOCAB_SIZE:(m + 1) * VOCAB_SIZE])
        b_moe = b_moe.at[m * MOE_PAD:m * MOE_PAD + VOCAB_SIZE].set(
            p["b_moe_gate"][0, m * VOCAB_SIZE:(m + 1) * VOCAB_SIZE])
    for m in range(MOE_MIXTURES):
        dst = (MOE_MIXTURES + 1 + m) * MOE_PAD
        w_moe = w_moe.at[:, dst:dst + VOCAB_SIZE].set(
            p["w_moe_exp"][:, m * VOCAB_SIZE:(m + 1) * VOCAB_SIZE])
        b_moe = b_moe.at[dst:dst + VOCAB_SIZE].set(
            p["b_moe_exp"][0, m * VOCAB_SIZE:(m + 1) * VOCAB_SIZE])

    # pack all 1-row vector parameters into one operand (rows zero-padded to VEC_W)
    vecs = jnp.zeros((8, VEC_W), jnp.float32)
    vecs = vecs.at[0, :FEATURE_SIZE].set(p["in_scale"][0])
    vecs = vecs.at[1, :FEATURE_SIZE].set(p["in_bias"][0])
    vecs = vecs.at[2, :CLUSTER_SIZE].set(p["cbn_b_v"][0])
    vecs = vecs.at[2, CLUSTER_SIZE:NCLUST].set(p["cbn_b_a"][0])
    vecs = vecs.at[3, :HIDDEN_SIZE].set(p["bn1_b"][0])            # hidden1 BN bias
    vecs = vecs.at[4, :HIDDEN_SIZE].set(p["bng_b"][0])            # gating BN bias
    vecs = vecs.at[5, :MOE_W].set(b_moe)

    return {
        "vecs": vecs,
        "cw_fused": cw_fused,
        "fvconst_v": tower_consts(p["cw_v"], p["covar_v"]),       # [4, 8, 32]
        "fvconst_a": tower_consts(p["cw_a"], p["covar_a"]),       # [4, 4, 16]
        "w1_v": w1_v,                                             # [2, 256, 32]
        "w1_a": w1_a,                                             # [2, 64, 32]
        "wg_eff": p["wg"] * p["bng_s"],                           # [32, 32]
        "w_moe": w_moe,                                           # [32, 640]
    }


if __name__ == "__main__":
    key = jax.random.PRNGKey(0)
    k_in, k_par = jax.random.split(key)
    params = init_params(k_par)
    fparams = fold_params(params)
    x = jax.random.normal(k_in, (BATCH, NUM_FRAMES, FEATURE_SIZE), jnp.float32)

    prob = jax.jit(netfv_model_forward)(x, fparams)
    prob = jax.block_until_ready(prob)

    assert prob.shape == (BATCH, VOCAB_SIZE), prob.shape
    assert bool(jnp.all(jnp.isfinite(prob)))
    # approx reciprocal (~1e-3 rel) -> allow a hair of slack on the bounds
    assert bool(jnp.all(prob >= -1e-3)) and bool(jnp.all(prob <= 1.0 + 1e-3))
    print("KERNEL_OK")
</pallas_src>

<mosaic_0001>
module attributes {stable_mosaic.version = 11 : i64} {
  func.func @fused_kernel(%arg0: memref<2x8x48xf32, #tpu.memory_space<vmem>>, %arg1: memref<8x640xf32, #tpu.memory_space<vmem>>, %arg2: memref<48x12xf32, #tpu.memory_space<vmem>>, %arg3: memref<4x8x32xf32, #tpu.memory_space<vmem>>, %arg4: memref<4x4x16xf32, #tpu.memory_space<vmem>>, %arg5: memref<2x256x32xf32, #tpu.memory_space<vmem>>, %arg6: memref<2x64x32xf32, #tpu.memory_space<vmem>>, %arg7: memref<32x32xf32, #tpu.memory_space<vmem>>, %arg8: memref<32x640xf32, #tpu.memory_space<vmem>>, %arg9: memref<2x16xf32, #tpu.memory_space<vmem>>) attributes {dimension_semantics = [], scalar_prefetch = 0 : i64, scratch_operands = 0 : i64, tpu.core_type = #tpu.core_type<tc>} {
    %c0 = arith.constant 0 : index
    %c0_0 = arith.constant 0 : index
    %c0_1 = arith.constant 0 : index
    %0 = vector.load %arg0[%c0, %c0_0, %c0_1] : memref<2x8x48xf32, #tpu.memory_space<vmem>>, vector<2x8x48xf32>
    %c0_2 = arith.constant 0 : index
    %c0_3 = arith.constant 0 : index
    %1 = vector.load %arg1[%c0_2, %c0_3] : memref<8x640xf32, #tpu.memory_space<vmem>>, vector<1x48xf32>
    %2 = vector.shape_cast %1 : vector<1x48xf32> to vector<1x1x48xf32>
    %3 = vector.broadcast %2 : vector<1x1x48xf32> to vector<2x8x48xf32>
    %4 = arith.mulf %0, %3 : vector<2x8x48xf32>
    %c1 = arith.constant 1 : index
    %c0_4 = arith.constant 0 : index
    %5 = vector.load %arg1[%c1, %c0_4] : memref<8x640xf32, #tpu.memory_space<vmem>>, vector<1x48xf32>
    %6 = vector.shape_cast %5 : vector<1x48xf32> to vector<1x1x48xf32>
    %7 = vector.broadcast %6 : vector<1x1x48xf32> to vector<2x8x48xf32>
    %8 = arith.addf %4, %7 : vector<2x8x48xf32>
    %9 = vector.shape_cast %8 : vector<2x8x48xf32> to vector<16x48xf32>
    %c0_5 = arith.constant 0 : index
    %c0_6 = arith.constant 0 : index
    %10 = vector.load %arg2[%c0_5, %c0_6] : memref<48x12xf32, #tpu.memory_space<vmem>>, vector<48x12xf32>
    %cst = arith.constant dense<0.000000e+00> : vector<16x12xf32>
    %11 = tpu.matmul %9, %10, %cst {dimension_numbers = #tpu.dot_dimension_numbers<[1], [0], [0], [1], [0, 0, 1, 1], [], []>} : vector<16x48xf32>, vector<48x12xf32>, vector<16x12xf32> -> vector<16x12xf32>
    %c2 = arith.constant 2 : index
    %c0_7 = arith.constant 0 : index
    %12 = vector.load %arg1[%c2, %c0_7] : memref<8x640xf32, #tpu.memory_space<vmem>>, vector<1x12xf32>
    %13 = vector.broadcast %12 : vector<1x12xf32> to vector<16x12xf32>
    %14 = arith.addf %11, %13 : vector<16x12xf32>
    %15 = vector.extract_strided_slice %14 {offsets = [0, 0], sizes = [16, 8], strides = [1, 1]} : vector<16x12xf32> to vector<16x8xf32>
    %cst_8 = arith.constant dense<0xFF800000> : vector<16xf32>
    %16 = vector.multi_reduction <maximumf>, %15, %cst_8 [1] : vector<16x8xf32> to vector<16xf32>
    %17 = vector.shape_cast %16 : vector<16xf32> to vector<16x1xf32>
    %18 = vector.broadcast %17 : vector<16x1xf32> to vector<16x8xf32>
    %19 = arith.subf %15, %18 : vector<16x8xf32>
    %20 = math.exp %19 : vector<16x8xf32>
    %cst_9 = arith.constant dense<0.000000e+00> : vector<16xf32>
    %21 = vector.multi_reduction <add>, %20, %cst_9 [1] : vector<16x8xf32> to vector<16xf32>
    %22 = vector.shape_cast %21 : vector<16xf32> to vector<16x1xf32>
    %23 = tpu.reciprocal %22 {approx = true} : vector<16x1xf32> -> vector<16x1xf32>
    %24 = vector.broadcast %23 : vector<16x1xf32> to vector<16x8xf32>
    %25 = arith.mulf %20, %24 : vector<16x8xf32>
    %26 = vector.shape_cast %25 : vector<16x8xf32> to vector<2x8x8xf32>
    %27 = vector.extract_strided_slice %14 {offsets = [0, 8], sizes = [16, 4], strides = [1, 1]} : vector<16x12xf32> to vector<16x4xf32>
    %cst_10 = arith.constant dense<0xFF800000> : vector<16xf32>
    %28 = vector.multi_reduction <maximumf>, %27, %cst_10 [1] : vector<16x4xf32> to vector<16xf32>
    %29 = vector.shape_cast %28 : vector<16xf32> to vector<16x1xf32>
    %30 = vector.broadcast %29 : vector<16x1xf32> to vector<16x4xf32>
    %31 = arith.subf %27, %30 : vector<16x4xf32>
    %32 = math.exp %31 : vector<16x4xf32>
    %cst_11 = arith.constant dense<0.000000e+00> : vector<16xf32>
    %33 = vector.multi_reduction <add>, %32, %cst_11 [1] : vector<16x4xf32> to vector<16xf32>
    %34 = vector.shape_cast %33 : vector<16xf32> to vector<16x1xf32>
    %35 = tpu.reciprocal %34 {approx = true} : vector<16x1xf32> -> vector<16x1xf32>
    %36 = vector.broadcast %35 : vector<16x1xf32> to vector<16x4xf32>
    %37 = arith.mulf %32, %36 : vector<16x4xf32>
    %38 = vector.shape_cast %37 : vector<16x4xf32> to vector<2x8x4xf32>
    %39 = vector.extract_strided_slice %8 {offsets = [0, 0, 0], sizes = [2, 8, 32], strides = [1, 1, 1]} : vector<2x8x48xf32> to vector<2x8x32xf32>
    %c0_12 = arith.constant 0 : index
    %c0_13 = arith.constant 0 : index
    %c0_14 = arith.constant 0 : index
    %40 = vector.load %arg3[%c0_12, %c0_13, %c0_14] : memref<4x8x32xf32, #tpu.memory_space<vmem>>, vector<1x8x32xf32>
    %41 = vector.shape_cast %40 : vector<1x8x32xf32> to vector<8x32xf32>
    %c1_15 = arith.constant 1 : index
    %c0_16 = arith.constant 0 : index
    %c0_17 = arith.constant 0 : index
    %42 = vector.load %arg3[%c1_15, %c0_16, %c0_17] : memref<4x8x32xf32, #tpu.memory_space<vmem>>, vector<1x8x32xf32>
    %43 = vector.shape_cast %42 : vector<1x8x32xf32> to vector<8x32xf32>
    %c2_18 = arith.constant 2 : index
    %c0_19 = arith.constant 0 : index
    %c0_20 = arith.constant 0 : index
    %44 = vector.load %arg3[%c2_18, %c0_19, %c0_20] : memref<4x8x32xf32, #tpu.memory_space<vmem>>, vector<1x8x32xf32>
    %45 = vector.shape_cast %44 : vector<1x8x32xf32> to vector<8x32xf32>
    %c3 = arith.constant 3 : index
    %c0_21 = arith.constant 0 : index
    %c0_22 = arith.constant 0 : index
    %46 = vector.load %arg3[%c3, %c0_21, %c0_22] : memref<4x8x32xf32, #tpu.memory_space<vmem>>, vector<1x8x32xf32>
    %47 = vector.shape_cast %46 : vector<1x8x32xf32> to vector<8x32xf32>
    "tpu.trace_start"() <{level = 10 : i32, message = "btc,btf->bcf"}> : () -> ()
    %cst_23 = arith.constant dense<0.000000e+00> : vector<2x8x32xf32>
    %48 = tpu.matmul %26, %39, %cst_23 {dimension_numbers = #tpu.dot_dimension_numbers<[1], [1], [2], [2], [0, 0, 0, 2, 1, 2], [0], [0]>} : vector<2x8x8xf32>, vector<2x8x32xf32>, vector<2x8x32xf32> -> vector<2x8x32xf32>
    "tpu.trace_stop"() : () -> ()
    %49 = arith.mulf %39, %39 : vector<2x8x32xf32>
    "tpu.trace_start"() <{level = 10 : i32, message = "btc,btf->bcf"}> : () -> ()
    %cst_24 = arith.constant dense<0.000000e+00> : vector<2x8x32xf32>
    %50 = tpu.matmul %26, %49, %cst_24 {dimension_numbers = #tpu.dot_dimension_numbers<[1], [1], [2], [2], [0, 0, 0, 2, 1, 2], [0], [0]>} : vector<2x8x8xf32>, vector<2x8x32xf32>, vector<2x8x32xf32> -> vector<2x8x32xf32>
    %cst_25 = arith.constant 1.000000e+00 : f32
    "tpu.trace_stop"() : () -> ()
    %51 = vector.broadcast %cst_25 : f32 to vector<2x8x32xf32>
    "tpu.trace_start"() <{level = 10 : i32, message = "btc,btf->bcf"}> : () -> ()
    %cst_26 = arith.constant dense<0.000000e+00> : vector<2x8x32xf32>
    %52 = tpu.matmul %26, %51, %cst_26 {dimension_numbers = #tpu.dot_dimension_numbers<[1], [1], [2], [2], [0, 0, 0, 2, 1, 2], [0], [0]>} : vector<2x8x8xf32>, vector<2x8x32xf32>, vector<2x8x32xf32> -> vector<2x8x32xf32>
    "tpu.trace_stop"() : () -> ()
    %53 = vector.shape_cast %43 : vector<8x32xf32> to vector<1x8x32xf32>
    %54 = vector.broadcast %53 : vector<1x8x32xf32> to vector<2x8x32xf32>
    %55 = arith.mulf %52, %54 : vector<2x8x32xf32>
    %56 = arith.addf %55, %50 : vector<2x8x32xf32>
    %cst_27 = arith.constant 2.000000e+00 : f32
    %57 = vector.broadcast %cst_27 : f32 to vector<2x8x32xf32>
    %58 = arith.mulf %57, %48 : vector<2x8x32xf32>
    %59 = vector.shape_cast %41 : vector<8x32xf32> to vector<1x8x32xf32>
    %60 = vector.broadcast %59 : vector<1x8x32xf32> to vector<2x8x32xf32>
    %61 = arith.mulf %58, %60 : vector<2x8x32xf32>
    %62 = arith.subf %56, %61 : vector<2x8x32xf32>
    %63 = vector.shape_cast %47 : vector<8x32xf32> to vector<1x8x32xf32>
    %64 = vector.broadcast %63 : vector<1x8x32xf32> to vector<2x8x32xf32>
    %65 = arith.mulf %62, %64 : vector<2x8x32xf32>
    %66 = arith.subf %65, %52 : vector<2x8x32xf32>
    %67 = arith.mulf %66, %66 : vector<2x8x32xf32>
    %cst_28 = arith.constant dense<0.000000e+00> : vector<2x8xf32>
    %68 = vector.multi_reduction <add>, %67, %cst_28 [2] : vector<2x8x32xf32> to vector<2x8xf32>
    %69 = vector.shape_cast %68 : vector<2x8xf32> to vector<2x8x1xf32>
    %cst_29 = arith.constant dense<0.000000e+00> : vector<2x1xf32>
    %70 = vector.multi_reduction <add>, %69, %cst_29 [1] : vector<2x8x1xf32> to vector<2x1xf32>
    %71 = vector.shape_cast %70 : vector<2x1xf32> to vector<2x1x1xf32>
    %cst_30 = arith.constant 1.000000e-24 : f32
    %72 = vector.broadcast %cst_30 : f32 to vector<2x1x1xf32>
    %73 = arith.maximumf %71, %72 : vector<2x1x1xf32>
    %74 = math.rsqrt %73 : vector<2x1x1xf32>
    %75 = vector.broadcast %74 : vector<2x1x1xf32> to vector<2x8x32xf32>
    %76 = arith.mulf %66, %75 : vector<2x8x32xf32>
    %77 = vector.shape_cast %41 : vector<8x32xf32> to vector<1x8x32xf32>
    %78 = vector.broadcast %77 : vector<1x8x32xf32> to vector<2x8x32xf32>
    %79 = arith.mulf %52, %78 : vector<2x8x32xf32>
    %80 = arith.subf %48, %79 : vector<2x8x32xf32>
    %81 = vector.shape_cast %45 : vector<8x32xf32> to vector<1x8x32xf32>
    %82 = vector.broadcast %81 : vector<1x8x32xf32> to vector<2x8x32xf32>
    %83 = arith.mulf %80, %82 : vector<2x8x32xf32>
    %84 = arith.mulf %83, %83 : vector<2x8x32xf32>
    %cst_31 = arith.constant dense<0.000000e+00> : vector<2x8xf32>
    %85 = vector.multi_reduction <add>, %84, %cst_31 [2] : vector<2x8x32xf32> to vector<2x8xf32>
    %86 = vector.shape_cast %85 : vector<2x8xf32> to vector<2x8x1xf32>
    %cst_32 = arith.constant 1.000000e-24 : f32
    %87 = vector.broadcast %cst_32 : f32 to vector<2x8x1xf32>
    %88 = arith.maximumf %86, %87 : vector<2x8x1xf32>
    %89 = math.rsqrt %88 : vector<2x8x1xf32>
    %90 = vector.broadcast %89 : vector<2x8x1xf32> to vector<2x8x32xf32>
    %91 = arith.mulf %83, %90 : vector<2x8x32xf32>
    %92 = arith.mulf %91, %91 : vector<2x8x32xf32>
    %cst_33 = arith.constant dense<0.000000e+00> : vector<2x8xf32>
    %93 = vector.multi_reduction <add>, %92, %cst_33 [2] : vector<2x8x32xf32> to vector<2x8xf32>
    %94 = vector.shape_cast %93 : vector<2x8xf32> to vector<2x8x1xf32>
    %cst_34 = arith.constant dense<0.000000e+00> : vector<2x1xf32>
    %95 = vector.multi_reduction <add>, %94, %cst_34 [1] : vector<2x8x1xf32> to vector<2x1xf32>
    %96 = vector.shape_cast %95 : vector<2x1xf32> to vector<2x1x1xf32>
    %cst_35 = arith.constant 1.000000e-24 : f32
    %97 = vector.broadcast %cst_35 : f32 to vector<2x1x1xf32>
    %98 = arith.maximumf %96, %97 : vector<2x1x1xf32>
    %99 = math.rsqrt %98 : vector<2x1x1xf32>
    %100 = vector.broadcast %99 : vector<2x1x1xf32> to vector<2x8x32xf32>
    %101 = arith.mulf %91, %100 : vector<2x8x32xf32>
    %102 = vector.shape_cast %101 : vector<2x8x32xf32> to vector<2x256xf32>
    %103 = vector.shape_cast %76 : vector<2x8x32xf32> to vector<2x256xf32>
    %104 = vector.extract_strided_slice %8 {offsets = [0, 0, 32], sizes = [2, 8, 16], strides = [1, 1, 1]} : vector<2x8x48xf32> to vector<2x8x16xf32>
    %c0_36 = arith.constant 0 : index
    %c0_37 = arith.constant 0 : index
    %c0_38 = arith.constant 0 : index
    %105 = vector.load %arg4[%c0_36, %c0_37, %c0_38] : memref<4x4x16xf32, #tpu.memory_space<vmem>>, vector<1x4x16xf32>
    %106 = vector.shape_cast %105 : vector<1x4x16xf32> to vector<4x16xf32>
    %c1_39 = arith.constant 1 : index
    %c0_40 = arith.constant 0 : index
    %c0_41 = arith.constant 0 : index
    %107 = vector.load %arg4[%c1_39, %c0_40, %c0_41] : memref<4x4x16xf32, #tpu.memory_space<vmem>>, vector<1x4x16xf32>
    %108 = vector.shape_cast %107 : vector<1x4x16xf32> to vector<4x16xf32>
    %c2_42 = arith.constant 2 : index
    %c0_43 = arith.constant 0 : index
    %c0_44 = arith.constant 0 : index
    %109 = vector.load %arg4[%c2_42, %c0_43, %c0_44] : memref<4x4x16xf32, #tpu.memory_space<vmem>>, vector<1x4x16xf32>
    %110 = vector.shape_cast %109 : vector<1x4x16xf32> to vector<4x16xf32>
    %c3_45 = arith.constant 3 : index
    %c0_46 = arith.constant 0 : index
    %c0_47 = arith.constant 0 : index
    %111 = vector.load %arg4[%c3_45, %c0_46, %c0_47] : memref<4x4x16xf32, #tpu.memory_space<vmem>>, vector<1x4x16xf32>
    %112 = vector.shape_cast %111 : vector<1x4x16xf32> to vector<4x16xf32>
    "tpu.trace_start"() <{level = 10 : i32, message = "btc,btf->bcf"}> : () -> ()
    %cst_48 = arith.constant dense<0.000000e+00> : vector<2x4x16xf32>
    %113 = tpu.matmul %38, %104, %cst_48 {dimension_numbers = #tpu.dot_dimension_numbers<[1], [1], [2], [2], [0, 0, 0, 2, 1, 2], [0], [0]>} : vector<2x8x4xf32>, vector<2x8x16xf32>, vector<2x4x16xf32> -> vector<2x4x16xf32>
    "tpu.trace_stop"() : () -> ()
    %114 = arith.mulf %104, %104 : vector<2x8x16xf32>
    "tpu.trace_start"() <{level = 10 : i32, message = "btc,btf->bcf"}> : () -> ()
    %cst_49 = arith.constant dense<0.000000e+00> : vector<2x4x16xf32>
    %115 = tpu.matmul %38, %114, %cst_49 {dimension_numbers = #tpu.dot_dimension_numbers<[1], [1], [2], [2], [0, 0, 0, 2, 1, 2], [0], [0]>} : vector<2x8x4xf32>, vector<2x8x16xf32>, vector<2x4x16xf32> -> vector<2x4x16xf32>
    %cst_50 = arith.constant 1.000000e+00 : f32
    "tpu.trace_stop"() : () -> ()
    %116 = vector.broadcast %cst_50 : f32 to vector<2x8x16xf32>
    "tpu.trace_start"() <{level = 10 : i32, message = "btc,btf->bcf"}> : () -> ()
    %cst_51 = arith.constant dense<0.000000e+00> : vector<2x4x16xf32>
    %117 = tpu.matmul %38, %116, %cst_51 {dimension_numbers = #tpu.dot_dimension_numbers<[1], [1], [2], [2], [0, 0, 0, 2, 1, 2], [0], [0]>} : vector<2x8x4xf32>, vector<2x8x16xf32>, vector<2x4x16xf32> -> vector<2x4x16xf32>
    "tpu.trace_stop"() : () -> ()
    %118 = vector.shape_cast %108 : vector<4x16xf32> to vector<1x4x16xf32>
    %119 = vector.broadcast %118 : vector<1x4x16xf32> to vector<2x4x16xf32>
    %120 = arith.mulf %117, %119 : vector<2x4x16xf32>
    %121 = arith.addf %120, %115 : vector<2x4x16xf32>
    %cst_52 = arith.constant 2.000000e+00 : f32
    %122 = vector.broadcast %cst_52 : f32 to vector<2x4x16xf32>
    %123 = arith.mulf %122, %113 : vector<2x4x16xf32>
    %124 = vector.shape_cast %106 : vector<4x16xf32> to vector<1x4x16xf32>
    %125 = vector.broadcast %124 : vector<1x4x16xf32> to vector<2x4x16xf32>
    %126 = arith.mulf %123, %125 : vector<2x4x16xf32>
    %127 = arith.subf %121, %126 : vector<2x4x16xf32>
    %128 = vector.shape_cast %112 : vector<4x16xf32> to vector<1x4x16xf32>
    %129 = vector.broadcast %128 : vector<1x4x16xf32> to vector<2x4x16xf32>
    %130 = arith.mulf %127, %129 : vector<2x4x16xf32>
    %131 = arith.subf %130, %117 : vector<2x4x16xf32>
    %132 = arith.mulf %131, %131 : vector<2x4x16xf32>
    %cst_53 = arith.constant dense<0.000000e+00> : vector<2x4xf32>
    %133 = vector.multi_reduction <add>, %132, %cst_53 [2] : vector<2x4x16xf32> to vector<2x4xf32>
    %134 = vector.shape_cast %133 : vector<2x4xf32> to vector<2x4x1xf32>
    %cst_54 = arith.constant dense<0.000000e+00> : vector<2x1xf32>
    %135 = vector.multi_reduction <add>, %134, %cst_54 [1] : vector<2x4x1xf32> to vector<2x1xf32>
    %136 = vector.shape_cast %135 : vector<2x1xf32> to vector<2x1x1xf32>
    %cst_55 = arith.constant 1.000000e-24 : f32
    %137 = vector.broadcast %cst_55 : f32 to vector<2x1x1xf32>
    %138 = arith.maximumf %136, %137 : vector<2x1x1xf32>
    %139 = math.rsqrt %138 : vector<2x1x1xf32>
    %140 = vector.broadcast %139 : vector<2x1x1xf32> to vector<2x4x16xf32>
    %141 = arith.mulf %131, %140 : vector<2x4x16xf32>
    %142 = vector.shape_cast %106 : vector<4x16xf32> to vector<1x4x16xf32>
    %143 = vector.broadcast %142 : vector<1x4x16xf32> to vector<2x4x16xf32>
    %144 = arith.mulf %117, %143 : vector<2x4x16xf32>
    %145 = arith.subf %113, %144 : vector<2x4x16xf32>
    %146 = vector.shape_cast %110 : vector<4x16xf32> to vector<1x4x16xf32>
    %147 = vector.broadcast %146 : vector<1x4x16xf32> to vector<2x4x16xf32>
    %148 = arith.mulf %145, %147 : vector<2x4x16xf32>
    %149 = arith.mulf %148, %148 : vector<2x4x16xf32>
    %cst_56 = arith.constant dense<0.000000e+00> : vector<2x4xf32>
    %150 = vector.multi_reduction <add>, %149, %cst_56 [2] : vector<2x4x16xf32> to vector<2x4xf32>
    %151 = vector.shape_cast %150 : vector<2x4xf32> to vector<2x4x1xf32>
    %cst_57 = arith.constant 1.000000e-24 : f32
    %152 = vector.broadcast %cst_57 : f32 to vector<2x4x1xf32>
    %153 = arith.maximumf %151, %152 : vector<2x4x1xf32>
    %154 = math.rsqrt %153 : vector<2x4x1xf32>
    %155 = vector.broadcast %154 : vector<2x4x1xf32> to vector<2x4x16xf32>
    %156 = arith.mulf %148, %155 : vector<2x4x16xf32>
    %157 = arith.mulf %156, %156 : vector<2x4x16xf32>
    %cst_58 = arith.constant dense<0.000000e+00> : vector<2x4xf32>
    %158 = vector.multi_reduction <add>, %157, %cst_58 [2] : vector<2x4x16xf32> to vector<2x4xf32>
    %159 = vector.shape_cast %158 : vector<2x4xf32> to vector<2x4x1xf32>
    %cst_59 = arith.constant dense<0.000000e+00> : vector<2x1xf32>
    %160 = vector.multi_reduction <add>, %159, %cst_59 [1] : vector<2x4x1xf32> to vector<2x1xf32>
    %161 = vector.shape_cast %160 : vector<2x1xf32> to vector<2x1x1xf32>
    %cst_60 = arith.constant 1.000000e-24 : f32
    %162 = vector.broadcast %cst_60 : f32 to vector<2x1x1xf32>
    %163 = arith.maximumf %161, %162 : vector<2x1x1xf32>
    %164 = math.rsqrt %163 : vector<2x1x1xf32>
    %165 = vector.broadcast %164 : vector<2x1x1xf32> to vector<2x4x16xf32>
    %166 = arith.mulf %156, %165 : vector<2x4x16xf32>
    %167 = vector.shape_cast %166 : vector<2x4x16xf32> to vector<2x64xf32>
    %168 = vector.shape_cast %141 : vector<2x4x16xf32> to vector<2x64xf32>
    %c0_61 = arith.constant 0 : index
    %c0_62 = arith.constant 0 : index
    %c0_63 = arith.constant 0 : index
    %169 = vector.load %arg5[%c0_61, %c0_62, %c0_63] : memref<2x256x32xf32, #tpu.memory_space<vmem>>, vector<1x256x32xf32>
    %170 = vector.shape_cast %169 : vector<1x256x32xf32> to vector<256x32xf32>
    %cst_64 = arith.constant dense<0.000000e+00> : vector<2x32xf32>
    %171 = tpu.matmul %102, %170, %cst_64 {dimension_numbers = #tpu.dot_dimension_numbers<[1], [0], [0], [1], [0, 0, 1, 1], [], []>} : vector<2x256xf32>, vector<256x32xf32>, vector<2x32xf32> -> vector<2x32xf32>
    %c1_65 = arith.constant 1 : index
    %c0_66 = arith.constant 0 : index
    %c0_67 = arith.constant 0 : index
    %172 = vector.load %arg5[%c1_65, %c0_66, %c0_67] : memref<2x256x32xf32, #tpu.memory_space<vmem>>, vector<1x256x32xf32>
    %173 = vector.shape_cast %172 : vector<1x256x32xf32> to vector<256x32xf32>
    %cst_68 = arith.constant dense<0.000000e+00> : vector<2x32xf32>
    %174 = tpu.matmul %103, %173, %cst_68 {dimension_numbers = #tpu.dot_dimension_numbers<[1], [0], [0], [1], [0, 0, 1, 1], [], []>} : vector<2x256xf32>, vector<256x32xf32>, vector<2x32xf32> -> vector<2x32xf32>
    %175 = arith.addf %171, %174 : vector<2x32xf32>
    %c0_69 = arith.constant 0 : index
    %c0_70 = arith.constant 0 : index
    %c0_71 = arith.constant 0 : index
    %176 = vector.load %arg6[%c0_69, %c0_70, %c0_71] : memref<2x64x32xf32, #tpu.memory_space<vmem>>, vector<1x64x32xf32>
    %177 = vector.shape_cast %176 : vector<1x64x32xf32> to vector<64x32xf32>
    %cst_72 = arith.constant dense<0.000000e+00> : vector<2x32xf32>
    %178 = tpu.matmul %167, %177, %cst_72 {dimension_numbers = #tpu.dot_dimension_numbers<[1], [0], [0], [1], [0, 0, 1, 1], [], []>} : vector<2x64xf32>, vector<64x32xf32>, vector<2x32xf32> -> vector<2x32xf32>
    %179 = arith.addf %175, %178 : vector<2x32xf32>
    %c1_73 = arith.constant 1 : index
    %c0_74 = arith.constant 0 : index
    %c0_75 = arith.constant 0 : index
    %180 = vector.load %arg6[%c1_73, %c0_74, %c0_75] : memref<2x64x32xf32, #tpu.memory_space<vmem>>, vector<1x64x32xf32>
    %181 = vector.shape_cast %180 : vector<1x64x32xf32> to vector<64x32xf32>
    %cst_76 = arith.constant dense<0.000000e+00> : vector<2x32xf32>
    %182 = tpu.matmul %168, %181, %cst_76 {dimension_numbers = #tpu.dot_dimension_numbers<[1], [0], [0], [1], [0, 0, 1, 1], [], []>} : vector<2x64xf32>, vector<64x32xf32>, vector<2x32xf32> -> vector<2x32xf32>
    %183 = arith.addf %179, %182 : vector<2x32xf32>
    %c3_77 = arith.constant 3 : index
    %c0_78 = arith.constant 0 : index
    %184 = vector.load %arg1[%c3_77, %c0_78] : memref<8x640xf32, #tpu.memory_space<vmem>>, vector<1x32xf32>
    %185 = vector.broadcast %184 : vector<1x32xf32> to vector<2x32xf32>
    %186 = arith.addf %183, %185 : vector<2x32xf32>
    %cst_79 = arith.constant 0.000000e+00 : f32
    %cst_80 = arith.constant 6.000000e+00 : f32
    %187 = vector.broadcast %cst_79 : f32 to vector<2x32xf32>
    %188 = arith.maximumf %187, %186 : vector<2x32xf32>
    %189 = vector.broadcast %cst_80 : f32 to vector<2x32xf32>
    %190 = arith.minimumf %189, %188 : vector<2x32xf32>
    %c0_81 = arith.constant 0 : index
    %c0_82 = arith.constant 0 : index
    %191 = vector.load %arg7[%c0_81, %c0_82] : memref<32x32xf32, #tpu.memory_space<vmem>>, vector<32x32xf32>
    %cst_83 = arith.constant dense<0.000000e+00> : vector<2x32xf32>
    %192 = tpu.matmul %190, %191, %cst_83 {dimension_numbers = #tpu.dot_dimension_numbers<[1], [0], [0], [1], [0, 0, 1, 1], [], []>} : vector<2x32xf32>, vector<32x32xf32>, vector<2x32xf32> -> vector<2x32xf32>
    %c4 = arith.constant 4 : index
    %c0_84 = arith.constant 0 : index
    %193 = vector.load %arg1[%c4, %c0_84] : memref<8x640xf32, #tpu.memory_space<vmem>>, vector<1x32xf32>
    %194 = vector.broadcast %193 : vector<1x32xf32> to vector<2x32xf32>
    %195 = arith.addf %192, %194 : vector<2x32xf32>
    %cst_85 = arith.constant 5.000000e-01 : f32
    %196 = vector.broadcast %cst_85 : f32 to vector<2x32xf32>
    %197 = arith.mulf %196, %195 : vector<2x32xf32>
    %198 = math.tanh %197 : vector<2x32xf32>
    %cst_86 = arith.constant 5.000000e-01 : f32
    %199 = vector.broadcast %cst_86 : f32 to vector<2x32xf32>
    %200 = arith.mulf %199, %198 : vector<2x32xf32>
    %cst_87 = arith.constant 5.000000e-01 : f32
    %201 = vector.broadcast %cst_87 : f32 to vector<2x32xf32>
    %202 = arith.addf %200, %201 : vector<2x32xf32>
    %203 = arith.mulf %190, %202 : vector<2x32xf32>
    %c0_88 = arith.constant 0 : index
    %c0_89 = arith.constant 0 : index
    %204 = vector.load %arg8[%c0_88, %c0_89] : memref<32x640xf32, #tpu.memory_space<vmem>>, vector<32x640xf32>
    %cst_90 = arith.constant dense<0.000000e+00> : vector<2x640xf32>
    %205 = tpu.matmul %203, %204, %cst_90 {dimension_numbers = #tpu.dot_dimension_numbers<[1], [0], [0], [1], [0, 0, 1, 1], [], []>} : vector<2x32xf32>, vector<32x640xf32>, vector<2x640xf32> -> vector<2x640xf32>
    %c5 = arith.constant 5 : index
    %c0_91 = arith.constant 0 : index
    %206 = vector.load %arg1[%c5, %c0_91] : memref<8x640xf32, #tpu.memory_space<vmem>>, vector<1x640xf32>
    %207 = vector.broadcast %206 : vector<1x640xf32> to vector<2x640xf32>
    %208 = arith.addf %205, %207 : vector<2x640xf32>
    %209 = vector.extract_strided_slice %208 {offsets = [0, 0], sizes = [2, 16], strides = [1, 1]} : vector<2x640xf32> to vector<2x16xf32>
    %210 = vector.extract_strided_slice %208 {offsets = [0, 128], sizes = [2, 16], strides = [1, 1]} : vector<2x640xf32> to vector<2x16xf32>
    %211 = vector.extract_strided_slice %208 {offsets = [0, 256], sizes = [2, 16], strides = [1, 1]} : vector<2x640xf32> to vector<2x16xf32>
    %212 = arith.maximumf %209, %210 : vector<2x16xf32>
    %213 = arith.maximumf %212, %211 : vector<2x16xf32>
    %214 = arith.subf %209, %213 : vector<2x16xf32>
    %215 = math.exp %214 : vector<2x16xf32>
    %216 = arith.subf %210, %213 : vector<2x16xf32>
    %217 = math.exp %216 : vector<2x16xf32>
    %218 = arith.subf %211, %213 : vector<2x16xf32>
    %219 = math.exp %218 : vector<2x16xf32>
    %220 = arith.addf %215, %217 : vector<2x16xf32>
    %221 = arith.addf %220, %219 : vector<2x16xf32>
    %222 = vector.extract_strided_slice %208 {offsets = [0, 384], sizes = [2, 16], strides = [1, 1]} : vector<2x640xf32> to vector<2x16xf32>
    %cst_92 = arith.constant 5.000000e-01 : f32
    %223 = vector.broadcast %cst_92 : f32 to vector<2x16xf32>
    %224 = arith.mulf %223, %222 : vector<2x16xf32>
    %225 = math.tanh %224 : vector<2x16xf32>
    %cst_93 = arith.constant 5.000000e-01 : f32
    %226 = vector.broadcast %cst_93 : f32 to vector<2x16xf32>
    %227 = arith.mulf %226, %225 : vector<2x16xf32>
    %cst_94 = arith.constant 5.000000e-01 : f32
    %228 = vector.broadcast %cst_94 : f32 to vector<2x16xf32>
    %229 = arith.addf %227, %228 : vector<2x16xf32>
    %230 = arith.mulf %215, %229 : vector<2x16xf32>
    %231 = vector.extract_strided_slice %208 {offsets = [0, 512], sizes = [2, 16], strides = [1, 1]} : vector<2x640xf32> to vector<2x16xf32>
    %cst_95 = arith.constant 5.000000e-01 : f32
    %232 = vector.broadcast %cst_95 : f32 to vector<2x16xf32>
    %233 = arith.mulf %232, %231 : vector<2x16xf32>
    %234 = math.tanh %233 : vector<2x16xf32>
    %cst_96 = arith.constant 5.000000e-01 : f32
    %235 = vector.broadcast %cst_96 : f32 to vector<2x16xf32>
    %236 = arith.mulf %235, %234 : vector<2x16xf32>
    %cst_97 = arith.constant 5.000000e-01 : f32
    %237 = vector.broadcast %cst_97 : f32 to vector<2x16xf32>
    %238 = arith.addf %236, %237 : vector<2x16xf32>
    %239 = arith.mulf %217, %238 : vector<2x16xf32>
    %240 = arith.addf %230, %239 : vector<2x16xf32>
    %241 = tpu.reciprocal %221 {approx = true} : vector<2x16xf32> -> vector<2x16xf32>
    %242 = arith.mulf %240, %241 : vector<2x16xf32>
    %c0_98 = arith.constant 0 : index
    %c0_99 = arith.constant 0 : index
    %243 = vector.load %arg9[%c0_98, %c0_99] : memref<2x16xf32, #tpu.memory_space<vmem>>, vector<2x16xf32>
    tpu.vector_store %arg9[%c0_98, %c0_99], %242 {strides = array<i32>} : memref<2x16xf32, #tpu.memory_space<vmem>>, vector<2x16xf32>,
    return
  }
}

</mosaic_0001>

<llo_original>
// kernel: netfv_model_forward.1
$region0: #{netfv_model_forward.1}
  #allocation0 [shape = 'u32[]', space=smem, size = 0x4, offset = 0x4, fixed_abs, tag = 'smem constant byte address 0x4 - core index']
  #allocation1 [shape = 'u32[144,128]{1,0:T(1,128)}', space=vmem, size = 0x12000, scoped, tag = 'internal scratch']
  %s0 = inlined_call_operand.vmem [shape: f32[2,8,48], index: 0, kind: input, shape index: {}]
  %s1 = inlined_call_operand.vmem [shape: f32[8,640], index: 1, kind: input, shape index: {}]
  %s2 = inlined_call_operand.vmem [shape: f32[48,12], index: 2, kind: input, shape index: {}]
  %s3 = inlined_call_operand.vmem [shape: f32[4,8,32], index: 3, kind: input, shape index: {}]
  %s4 = inlined_call_operand.vmem [shape: f32[4,4,16], index: 4, kind: input, shape index: {}]
  %s5 = inlined_call_operand.vmem [shape: f32[2,256,32], index: 5, kind: input, shape index: {}]
  %s6 = inlined_call_operand.vmem [shape: f32[2,64,32], index: 6, kind: input, shape index: {}]
  %s7 = inlined_call_operand.vmem [shape: f32[32,32], index: 7, kind: input, shape index: {}]
  %s8 = inlined_call_operand.vmem [shape: f32[32,640], index: 8, kind: input, shape index: {}]
  %s9 = inlined_call_operand.hbm [shape: f32[2,16], index: 9, kind: output, shape index: {}]
  %s10 = sld [smem:[#allocation0]]
  $region46: #{netfv_model_forward.1} parent=0
    _
  %s12 = ssub.s32 1, %s10
  %s13 = scalar_select 0, %s12, %s10
  $region1: #{netfv_model_forward.1} parent=0
    #allocation2 [shape = 'u8[1024]{0}', space=vmem, size = 0x400, scoped, tag = 'output window, operand 0, single buffered']
    #allocation3 [shape = 's32[1]{0}', space=sflag, size = 0x4, scoped, tag = 'scoped memory for netfv_model_forward.1']
    %14 = vsyncpa [#allocation3], 0
    // Predicated region
    $region2: #{netfv_model_forward.1} parent=1 // pred_check
      _
    $region3: #{netfv_model_forward.1} parent=1 // pred_check_branch
      %16 = sbr.rel (0) target = $region5
    $region4: #{netfv_model_forward.1} parent=1 // pred_region
      _
    $region5: #{netfv_model_forward.1} parent=1 // pred_fallthru
      _
    // Predicated region
    $region6: #{netfv_model_forward.1} parent=1 // pred_check
      _
    $region7: #{netfv_model_forward.1} parent=1 // pred_check_branch
      %18 = sbr.rel (0) target = $region9
    $region8: #{netfv_model_forward.1} parent=1 // pred_region
      _
    $region9: #{netfv_model_forward.1} parent=1 // pred_fallthru
      _
    // Predicated region
    $region10: #{netfv_model_forward.1} parent=1 // pred_check
      _
    $region11: #{netfv_model_forward.1} parent=1 // pred_check_branch
      %20 = sbr.rel (0) target = $region13
    $region12: #{netfv_model_forward.1} parent=1 // pred_region
      _
    $region13: #{netfv_model_forward.1} parent=1 // pred_fallthru
      _
    // Predicated region
    $region14: #{netfv_model_forward.1} parent=1 // pred_check
      _
    $region15: #{netfv_model_forward.1} parent=1 // pred_check_branch
      %22 = sbr.rel (0) target = $region17
    $region16: #{netfv_model_forward.1} parent=1 // pred_region
      _
    $region17: #{netfv_model_forward.1} parent=1 // pred_fallthru
      _
    // Predicated region
    $region18: #{netfv_model_forward.1} parent=1 // pred_check
      _
    $region19: #{netfv_model_forward.1} parent=1 // pred_check_branch
      %24 = sbr.rel (0) target = $region21
    $region20: #{netfv_model_forward.1} parent=1 // pred_region
      _
    $region21: #{netfv_model_forward.1} parent=1 // pred_fallthru
      _
    // Predicated region
    $region22: #{netfv_model_forward.1} parent=1 // pred_check
      _
    $region23: #{netfv_model_forward.1} parent=1 // pred_check_branch
      %26 = sbr.rel (0) target = $region25
    $region24: #{netfv_model_forward.1} parent=1 // pred_region
      _
    $region25: #{netfv_model_forward.1} parent=1 // pred_fallthru
      _
    // Predicated region
    $region26: #{netfv_model_forward.1} parent=1 // pred_check
      _
    $region27: #{netfv_model_forward.1} parent=1 // pred_check_branch
      %28 = sbr.rel (0) target = $region29
    $region28: #{netfv_model_forward.1} parent=1 // pred_region
      _
    $region29: #{netfv_model_forward.1} parent=1 // pred_fallthru
      _
    // Predicated region
    $region30: #{netfv_model_forward.1} parent=1 // pred_check
      _
    $region31: #{netfv_model_forward.1} parent=1 // pred_check_branch
      %30 = sbr.rel (0) target = $region33
    $region32: #{netfv_model_forward.1} parent=1 // pred_region
      _
    $region33: #{netfv_model_forward.1} parent=1 // pred_fallthru
      _
    // Predicated region
    $region34: #{netfv_model_forward.1} parent=1 // pred_check
      _
    $region35: #{netfv_model_forward.1} parent=1 // pred_check_branch
      %32 = sbr.rel (0) target = $region37
    $region36: #{netfv_model_forward.1} parent=1 // pred_region
      _
    $region37: #{netfv_model_forward.1} parent=1 // pred_fallthru
      _
    %v33 = vld [vmem:[%s0] sm:$0xff]
    %v34 = vld [vmem:[%s0 + $0x8] sm:$0xff]
    %v35 = vld [vmem:[%s1] ss:$0 sm:$0xff]
    %v36 = vmul.f32 %v33, %v35
    %v37 = vmul.f32 %v34, %v35
    %v38 = vld [vmem:[%s1 + $0x1] ss:$0 sm:$0xff]
    %v39 = vadd.f32 %v36, %v38
    %v40 = vadd.f32 %v37, %v38
    %v41 = vld [vmem:[%s2] sm:$0xff]
    %v42 = vld [vmem:[%s2 + $0x8] sm:$0xff]
    %v43 = vld [vmem:[%s2 + $0x10] sm:$0xff]
    %v44 = vld [vmem:[%s2 + $0x18] sm:$0xff]
    %v45 = vld [vmem:[%s2 + $0x20] sm:$0xff]
    %v46 = vld [vmem:[%s2 + $0x28] sm:$0xff]
    %v47 = vld [vmem:[%s1 + $0x2] ss:$0 sm:$0xff]
    %vm48 = vcmask 392192
    %v50 = vsel %vm48, %v39, 0
    %v53 = vsel %vm48, %v40, 0
    %55 = vmatprep.subr.mxu0 0.0
    %56 = vmatpush1.msra.mxu0 %v41
    %57 = vmatprep.subr.mxu0 0.0
    %58 = vmatpush1.msra.mxu0 %v42
    %59 = vmatprep.subr.mxu0 0.0
    %60 = vmatpush1.msra.mxu0 %v43
    %61 = vmatprep.subr.mxu0 0.0
    %62 = vmatpush1.msra.mxu0 %v44
    %63 = vmatprep.subr.mxu0 0.0
    %64 = vmatpush1.msra.mxu0 %v45
    %65 = vmatprep.subr.mxu0 0.0
    %66 = vmatpush1.msra.mxu0 %v46
    %67 = vmatprep.subr.mxu0 0.0
    %68 = vmatpush1.msra.mxu0 0.0
    %69 = vmatprep.subr.mxu0 0.0
    %70 = vmatpush1.msra.mxu0 0.0
    %71 = vmatprep.subr.mxu0 0.0
    %72 = vmatpush1.msra.mxu0 0.0
    %73 = vmatprep.subr.mxu0 0.0
    %74 = vmatpush1.msra.mxu0 0.0
    %75 = vmatprep.subr.mxu0 0.0
    %76 = vmatpush1.msra.mxu0 0.0
    %77 = vmatprep.subr.mxu0 0.0
    %78 = vmatpush1.msra.mxu0 0.0
    %79 = vmatprep.subr.mxu0 0.0
    %80 = vmatpush1.msra.mxu0 0.0
    %81 = vmatprep.subr.mxu0 0.0
    %82 = vmatpush1.msra.mxu0 0.0
    %83 = vmatprep.subr.mxu0 0.0
    %84 = vmatpush1.msra.mxu0 0.0
    %85 = vmatprep.subr.mxu0 0.0
    %86 = vmatpush1.msra.mxu0 0.0
    %87 = vmatprep.subr.mxu0 0.0
    %88 = vmatpush1.msra.mxu0 0.0
    %89 = vmatprep.subr.mxu0 0.0
    %90 = vmatpush1.msra.mxu0 0.0
    %91 = vmatprep.subr.mxu0 0.0
    %92 = vmatpush1.msra.mxu0 0.0
    %93 = vmatprep.subr.mxu0 0.0
    %94 = vmatpush1.msra.mxu0 0.0
    %95 = vmatprep.subr.mxu0 0.0
    %96 = vmatpush1.msra.mxu0 0.0
    %97 = vmatprep.subr.mxu0 0.0
    %98 = vmatpush1.msra.mxu0 0.0
    %99 = vmatprep.subr.mxu0 0.0
    %100 = vmatpush1.msra.mxu0 0.0
    %101 = vmatprep.subr.mxu0 0.0
    %102 = vmatpush1.msra.mxu0 0.0
    %103 = vmatprep.subr.mxu0 0.0
    %104 = vmatpush1.msra.mxu0 0.0
    %105 = vmatprep.subr.mxu0 0.0
    %106 = vmatpush1.msra.mxu0 0.0
    %107 = vmatprep.subr.mxu0 0.0
    %108 = vmatpush1.msra.mxu0 0.0
    %109 = vmatprep.subr.mxu0 0.0
    %110 = vmatpush1.msra.mxu0 0.0
    %111 = vmatprep.subr.mxu0 0.0
    %112 = vmatpush1.msra.mxu0 0.0
    %113 = vmatprep.subr.mxu0 0.0
    %114 = vmatpush1.msra.mxu0 0.0
    %115 = vmatprep.subr.mxu0 0.0
    %116 = vmatpush1.msra.mxu0 0.0
    %117 = vmatprep.subr.mxu0 0.0
    %118 = vmatpush1.msra.mxu0 0.0
    %119 = vmatprep.mubr.f32.mxu0 0.0
    %120 = vmatmul.mubr.f32.gmra.mrb[0].mxu0 %v50
    %v121 = vpop.f32.mrb[0].mxu0
    %v122 = vadd.f32 %v47, %v121
    %v123 = vpop.f32.mrb[0].mxu0
    %124 = vmatprep.mubr.f32.mxu0 0.0
    %125 = vmatmul.mubr.f32.gmra.mrb[0].mxu0 %v53
    %v126 = vpop.f32.mrb[0].mxu0
    %v127 = vadd.f32 %v47, %v126
    %v128 = vpop.f32.mrb[0].mxu0
    %129 = vdwg.mxu0
    %vm130 = vcmask 64512
    %v131 = vsel %vm130, %v122, -inf
    %132 = vmax.xlane.f32.xlu0 %v131
    %v133 = vpop.xlane.xlu0 %132
    %v134 = vsel %vm130, %v127, -inf
    %135 = vmax.xlane.f32.xlu0 %v134
    %v136 = vpop.xlane.xlu0 %135
    %v137 = vsub.f32 %v122, %v133
    %v138 = vsub.f32 %v127, %v136
    %v139 = vmul.f32 %v137, 1.442695
    %v140 = vpow.pop %v139
    %v141 = vmul.f32 %v138, 1.442695
    %v142 = vpow.pop %v141
    %v143 = vsel %vm130, %v140, 0.0
    %144 = vadd.xlane.f32.xlu0 %v143
    %v145 = vpop.xlane.xlu0 %144
    %v146 = vsel %vm130, %v142, 0.0
    %147 = vadd.xlane.f32.xlu0 %v146
    %v148 = vpop.xlane.xlu0 %147
    %v149 = vrcp.pop %v145
    %v150 = vrcp.pop %v148
    %v151 = vmul.f32 %v140, %v149
    %v152 = vmul.f32 %v142, %v150
    %vm153 = vcmask 97344
    %v154 = vsel %vm153, %v122, -inf
    %155 = vmax.xlane.f32.xlu0 %v154
    %v156 = vpop.xlane.xlu0 %155
    %v157 = vsel %vm153, %v127, -inf
    %158 = vmax.xlane.f32.xlu0 %v157
    %v159 = vpop.xlane.xlu0 %158
    %v160 = vsub.f32 %v122, %v156
    %v161 = vsub.f32 %v127, %v159
    %v162 = vmul.f32 %v160, 1.442695
    %v163 = vpow.pop %v162
    %v164 = vmul.f32 %v161, 1.442695
    %v165 = vpow.pop %v164
    %168 = vrot.lane.b32.xlu0 %v163, 120
    %v169 = vpop.permute.xlu0 %168
    %170 = vrot.lane.b32.xlu0 %v165, 120
    %v171 = vpop.permute.xlu0 %170
    %vm174 = vcmask 31744
    %v175 = vsel %vm174, %v169, 0.0
    %176 = vadd.xlane.f32.xlu0 %v175
    %v177 = vpop.xlane.xlu0 %176
    %v178 = vsel %vm174, %v171, 0.0
    %179 = vadd.xlane.f32.xlu0 %v178
    %v180 = vpop.xlane.xlu0 %179
    %v181 = vrcp.pop %v177
    %v182 = vrcp.pop %v180
    %v183 = vmul.f32 %v163, %v181
    %v184 = vmul.f32 %v165, %v182
    %v185 = vld [vmem:[%s3] sm:$0xff]
    %s186 = scalar_lea.vmem %s3, 8
    %v187 = vld [vmem:[%s186] sm:$0xff]
    %s188 = scalar_lea.vmem %s3, 16
    %v189 = vld [vmem:[%s188] sm:$0xff]
    %s190 = scalar_lea.vmem %s3, 24
    %v191 = vld [vmem:[%s190] sm:$0xff]
    %192 = vxpose.xlu0.b32.start [1/16] %v151, 128
    %193 = vxpose.xlu0.b32.cont [2/16] 0.0, 128
    %194 = vxpose.xlu0.b32.cont [3/16] 0.0, 128
    %195 = vxpose.xlu0.b32.cont [4/16] 0.0, 128
    %196 = vxpose.xlu0.b32.cont [5/16] 0.0, 128
    %197 = vxpose.xlu0.b32.cont [6/16] 0.0, 128
    %198 = vxpose.xlu0.b32.cont [7/16] 0.0, 128
    %199 = vxpose.xlu0.b32.cont [8/16] 0.0, 128
    %200 = vxpose.xlu0.b32.cont [9/16] 0.0, 128
    %201 = vxpose.xlu0.b32.cont [10/16] 0.0, 128
    %202 = vxpose.xlu0.b32.cont [11/16] 0.0, 128
    %203 = vxpose.xlu0.b32.cont [12/16] 0.0, 128
    %204 = vxpose.xlu0.b32.cont [13/16] 0.0, 128
    %205 = vxpose.xlu0.b32.cont [14/16] 0.0, 128
    %206 = vxpose.xlu0.b32.cont [15/16] 0.0, 128
    %207 = vxpose.xlu0.b32.end [16/16] 0.0, 128
    %v208 = vpop.trf.xlu0
    %v209 = vpop.trf.xlu0
    %v210 = vpop.trf.xlu0
    %v211 = vpop.trf.xlu0
    %v212 = vpop.trf.xlu0
    %v213 = vpop.trf.xlu0
    %v214 = vpop.trf.xlu0
    %v215 = vpop.trf.xlu0
    %v216 = vpop.trf.xlu0
    %v217 = vpop.trf.xlu0
    %v218 = vpop.trf.xlu0
    %v219 = vpop.trf.xlu0
    %v220 = vpop.trf.xlu0
    %v221 = vpop.trf.xlu0
    %v222 = vpop.trf.xlu0
    %v223 = vpop.trf.xlu0
    %v225 = vsel %vm130, %v208, 0
    %227 = vmatprep.subr.mxu0 0.0
    %228 = vmatpush1.msra.mxu0 %v39
    %229 = vmatprep.subr.mxu0 0.0
    %230 = vmatpush1.msra.mxu0 0.0
    %231 = vmatprep.subr.mxu0 0.0
    %232 = vmatpush1.msra.mxu0 0.0
    %233 = vmatprep.subr.mxu0 0.0
    %234 = vmatpush1.msra.mxu0 0.0
    %235 = vmatprep.subr.mxu0 0.0
    %236 = vmatpush1.msra.mxu0 0.0
    %237 = vmatprep.subr.mxu0 0.0
    %238 = vmatpush1.msra.mxu0 0.0
    %239 = vmatprep.subr.mxu0 0.0
    %240 = vmatpush1.msra.mxu0 0.0
    %241 = vmatprep.subr.mxu0 0.0
    %242 = vmatpush1.msra.mxu0 0.0
    %243 = vmatprep.subr.mxu0 0.0
    %244 = vmatpush1.msra.mxu0 0.0
    %245 = vmatprep.subr.mxu0 0.0
    %246 = vmatpush1.msra.mxu0 0.0
    %247 = vmatprep.subr.mxu0 0.0
    %248 = vmatpush1.msra.mxu0 0.0
    %249 = vmatprep.subr.mxu0 0.0
    %250 = vmatpush1.msra.mxu0 0.0
    %251 = vmatprep.subr.mxu0 0.0
    %252 = vmatpush1.msra.mxu0 0.0
    %253 = vmatprep.subr.mxu0 0.0
    %254 = vmatpush1.msra.mxu0 0.0
    %255 = vmatprep.subr.mxu0 0.0
    %256 = vmatpush1.msra.mxu0 0.0
    %257 = vmatprep.subr.mxu0 0.0
    %258 = vmatpush1.msra.mxu0 0.0
    %259 = vmatprep.subr.mxu0 0.0
    %260 = vmatpush1.msra.mxu0 0.0
    %261 = vmatprep.subr.mxu0 0.0
    %262 = vmatpush1.msra.mxu0 0.0
    %263 = vmatprep.subr.mxu0 0.0
    %264 = vmatpush1.msra.mxu0 0.0
    %265 = vmatprep.subr.mxu0 0.0
    %266 = vmatpush1.msra.mxu0 0.0
    %267 = vmatprep.subr.mxu0 0.0
    %268 = vmatpush1.msra.mxu0 0.0
    %269 = vmatprep.subr.mxu0 0.0
    %270 = vmatpush1.msra.mxu0 0.0
    %271 = vmatprep.subr.mxu0 0.0
    %272 = vmatpush1.msra.mxu0 0.0
    %273 = vmatprep.subr.mxu0 0.0
    %274 = vmatpush1.msra.mxu0 0.0
    %275 = vmatprep.subr.mxu0 0.0
    %276 = vmatpush1.msra.mxu0 0.0
    %277 = vmatprep.subr.mxu0 0.0
    %278 = vmatpush1.msra.mxu0 0.0
    %279 = vmatprep.subr.mxu0 0.0
    %280 = vmatpush1.msra.mxu0 0.0
    %281 = vmatprep.subr.mxu0 0.0
    %282 = vmatpush1.msra.mxu0 0.0
    %283 = vmatprep.subr.mxu0 0.0
    %284 = vmatpush1.msra.mxu0 0.0
    %285 = vmatprep.subr.mxu0 0.0
    %286 = vmatpush1.msra.mxu0 0.0
    %287 = vmatprep.subr.mxu0 0.0
    %288 = vmatpush1.msra.mxu0 0.0
    %289 = vmatprep.subr.mxu0 0.0
    %290 = vmatpush1.msra.mxu0 0.0
    %291 = vmatprep.mubr.f32.mxu0 0.0
    %292 = vmatmul.mubr.f32.gmra.mrb[0].mxu0 %v225
    %v293 = vpop.f32.mrb[0].mxu0
    %v294 = vadd.f32 0.0, %v293
    %v295 = vpop.f32.mrb[0].mxu0
    %296 = vdwg.mxu0
    %297 = vxpose.xlu0.b32.start [1/16] %v152, 128
    %298 = vxpose.xlu0.b32.cont [2/16] 0.0, 128
    %299 = vxpose.xlu0.b32.cont [3/16] 0.0, 128
    %300 = vxpose.xlu0.b32.cont [4/16] 0.0, 128
    %301 = vxpose.xlu0.b32.cont [5/16] 0.0, 128
    %302 = vxpose.xlu0.b32.cont [6/16] 0.0, 128
    %303 = vxpose.xlu0.b32.cont [7/16] 0.0, 128
    %304 = vxpose.xlu0.b32.cont [8/16] 0.0, 128
    %305 = vxpose.xlu0.b32.cont [9/16] 0.0, 128
    %306 = vxpose.xlu0.b32.cont [10/16] 0.0, 128
    %307 = vxpose.xlu0.b32.cont [11/16] 0.0, 128
    %308 = vxpose.xlu0.b32.cont [12/16] 0.0, 128
    %309 = vxpose.xlu0.b32.cont [13/16] 0.0, 128
    %310 = vxpose.xlu0.b32.cont [14/16] 0.0, 128
    %311 = vxpose.xlu0.b32.cont [15/16] 0.0, 128
    %312 = vxpose.xlu0.b32.end [16/16] 0.0, 128
    %v313 = vpop.trf.xlu0
    %v314 = vpop.trf.xlu0
    %v315 = vpop.trf.xlu0
    %v316 = vpop.trf.xlu0
    %v317 = vpop.trf.xlu0
    %v318 = vpop.trf.xlu0
    %v319 = vpop.trf.xlu0
    %v320 = vpop.trf.xlu0
    %v321 = vpop.trf.xlu0
    %v322 = vpop.trf.xlu0
    %v323 = vpop.trf.xlu0
    %v324 = vpop.trf.xlu0
    %v325 = vpop.trf.xlu0
    %v326 = vpop.trf.xlu0
    %v327 = vpop.trf.xlu0
    %v328 = vpop.trf.xlu0
    %v330 = vsel %vm130, %v313, 0
    %332 = vmatprep.subr.mxu0 0.0
    %333 = vmatpush1.msra.mxu0 %v40
    %334 = vmatprep.subr.mxu0 0.0
    %335 = vmatpush1.msra.mxu0 0.0
    %336 = vmatprep.subr.mxu0 0.0
    %337 = vmatpush1.msra.mxu0 0.0
    %338 = vmatprep.subr.mxu0 0.0
    %339 = vmatpush1.msra.mxu0 0.0
    %340 = vmatprep.subr.mxu0 0.0
    %341 = vmatpush1.msra.mxu0 0.0
    %342 = vmatprep.subr.mxu0 0.0
    %343 = vmatpush1.msra.mxu0 0.0
    %344 = vmatprep.subr.mxu0 0.0
    %345 = vmatpush1.msra.mxu0 0.0
    %346 = vmatprep.subr.mxu0 0.0
    %347 = vmatpush1.msra.mxu0 0.0
    %348 = vmatprep.subr.mxu0 0.0
    %349 = vmatpush1.msra.mxu0 0.0
    %350 = vmatprep.subr.mxu0 0.0
    %351 = vmatpush1.msra.mxu0 0.0
    %352 = vmatprep.subr.mxu0 0.0
    %353 = vmatpush1.msra.mxu0 0.0
    %354 = vmatprep.subr.mxu0 0.0
    %355 = vmatpush1.msra.mxu0 0.0
    %356 = vmatprep.subr.mxu0 0.0
    %357 = vmatpush1.msra.mxu0 0.0
    %358 = vmatprep.subr.mxu0 0.0
    %359 = vmatpush1.msra.mxu0 0.0
    %360 = vmatprep.subr.mxu0 0.0
    %361 = vmatpush1.msra.mxu0 0.0
    %362 = vmatprep.subr.mxu0 0.0
    %363 = vmatpush1.msra.mxu0 0.0
    %364 = vmatprep.subr.mxu0 0.0
    %365 = vmatpush1.msra.mxu0 0.0
    %366 = vmatprep.subr.mxu0 0.0
    %367 = vmatpush1.msra.mxu0 0.0
    %368 = vmatprep.subr.mxu0 0.0
    %369 = vmatpush1.msra.mxu0 0.0
    %370 = vmatprep.subr.mxu0 0.0
    %371 = vmatpush1.msra.mxu0 0.0
    %372 = vmatprep.subr.mxu0 0.0
    %373 = vmatpush1.msra.mxu0 0.0
    %374 = vmatprep.subr.mxu0 0.0
    %375 = vmatpush1.msra.mxu0 0.0
    %376 = vmatprep.subr.mxu0 0.0
    %377 = vmatpush1.msra.mxu0 0.0
    %378 = vmatprep.subr.mxu0 0.0
    %379 = vmatpush1.msra.mxu0 0.0
    %380 = vmatprep.subr.mxu0 0.0
    %381 = vmatpush1.msra.mxu0 0.0
    %382 = vmatprep.subr.mxu0 0.0
    %383 = vmatpush1.msra.mxu0 0.0
    %384 = vmatprep.subr.mxu0 0.0
    %385 = vmatpush1.msra.mxu0 0.0
    %386 = vmatprep.subr.mxu0 0.0
    %387 = vmatpush1.msra.mxu0 0.0
    %388 = vmatprep.subr.mxu0 0.0
    %389 = vmatpush1.msra.mxu0 0.0
    %390 = vmatprep.subr.mxu0 0.0
    %391 = vmatpush1.msra.mxu0 0.0
    %392 = vmatprep.subr.mxu0 0.0
    %393 = vmatpush1.msra.mxu0 0.0
    %394 = vmatprep.subr.mxu0 0.0
    %395 = vmatpush1.msra.mxu0 0.0
    %396 = vmatprep.mubr.f32.mxu0 0.0
    %397 = vmatmul.mubr.f32.gmra.mrb[0].mxu0 %v330
    %v398 = vpop.f32.mrb[0].mxu0
    %v399 = vadd.f32 0.0, %v398
    %v400 = vpop.f32.mrb[0].mxu0
    %401 = vdwg.mxu0
    %v402 = vmul.f32 %v39, %v39
    %v403 = vmul.f32 %v40, %v40
    %404 = vmatprep.subr.mxu0 0.0
    %405 = vmatpush1.msra.mxu0 %v402
    %406 = vmatprep.subr.mxu0 0.0
    %407 = vmatpush1.msra.mxu0 0.0
    %408 = vmatprep.subr.mxu0 0.0
    %409 = vmatpush1.msra.mxu0 0.0
    %410 = vmatprep.subr.mxu0 0.0
    %411 = vmatpush1.msra.mxu0 0.0
    %412 = vmatprep.subr.mxu0 0.0
    %413 = vmatpush1.msra.mxu0 0.0
    %414 = vmatprep.subr.mxu0 0.0
    %415 = vmatpush1.msra.mxu0 0.0
    %416 = vmatprep.subr.mxu0 0.0
    %417 = vmatpush1.msra.mxu0 0.0
    %418 = vmatprep.subr.mxu0 0.0
    %419 = vmatpush1.msra.mxu0 0.0
    %420 = vmatprep.subr.mxu0 0.0
    %421 = vmatpush1.msra.mxu0 0.0
    %422 = vmatprep.subr.mxu0 0.0
    %423 = vmatpush1.msra.mxu0 0.0
    %424 = vmatprep.subr.mxu0 0.0
    %425 = vmatpush1.msra.mxu0 0.0
    %426 = vmatprep.subr.mxu0 0.0
    %427 = vmatpush1.msra.mxu0 0.0
    %428 = vmatprep.subr.mxu0 0.0
    %429 = vmatpush1.msra.mxu0 0.0
    %430 = vmatprep.subr.mxu0 0.0
    %431 = vmatpush1.msra.mxu0 0.0
    %432 = vmatprep.subr.mxu0 0.0
    %433 = vmatpush1.msra.mxu0 0.0
    %434 = vmatprep.subr.mxu0 0.0
    %435 = vmatpush1.msra.mxu0 0.0
    %436 = vmatprep.subr.mxu0 0.0
    %437 = vmatpush1.msra.mxu0 0.0
    %438 = vmatprep.subr.mxu0 0.0
    %439 = vmatpush1.msra.mxu0 0.0
    %440 = vmatprep.subr.mxu0 0.0
    %441 = vmatpush1.msra.mxu0 0.0
    %442 = vmatprep.subr.mxu0 0.0
    %443 = vmatpush1.msra.mxu0 0.0
    %444 = vmatprep.subr.mxu0 0.0
    %445 = vmatpush1.msra.mxu0 0.0
    %446 = vmatprep.subr.mxu0 0.0
    %447 = vmatpush1.msra.mxu0 0.0
    %448 = vmatprep.subr.mxu0 0.0
    %449 = vmatpush1.msra.mxu0 0.0
    %450 = vmatprep.subr.mxu0 0.0
    %451 = vmatpush1.msra.mxu0 0.0
    %452 = vmatprep.subr.mxu0 0.0
    %453 = vmatpush1.msra.mxu0 0.0
    %454 = vmatprep.subr.mxu0 0.0
    %455 = vmatpush1.msra.mxu0 0.0
    %456 = vmatprep.subr.mxu0 0.0
    %457 = vmatpush1.msra.mxu0 0.0
    %458 = vmatprep.subr.mxu0 0.0
    %459 = vmatpush1.msra.mxu0 0.0
    %460 = vmatprep.subr.mxu0 0.0
    %461 = vmatpush1.msra.mxu0 0.0
    %462 = vmatprep.subr.mxu0 0.0
    %463 = vmatpush1.msra.mxu0 0.0
    %464 = vmatprep.subr.mxu0 0.0
    %465 = vmatpush1.msra.mxu0 0.0
    %466 = vmatprep.subr.mxu0 0.0
    %467 = vmatpush1.msra.mxu0 0.0
    %468 = vmatprep.mubr.f32.mxu0 0.0
    %469 = vmatmul.mubr.f32.gmra.mrb[0].mxu0 %v225
    %v470 = vpop.f32.mrb[0].mxu0
    %v471 = vadd.f32 0.0, %v470
    %v472 = vpop.f32.mrb[0].mxu0
    %473 = vdwg.mxu0
    %474 = vmatprep.subr.mxu0 0.0
    %475 = vmatpush1.msra.mxu0 %v403
    %476 = vmatprep.subr.mxu0 0.0
    %477 = vmatpush1.msra.mxu0 0.0
    %478 = vmatprep.subr.mxu0 0.0
    %479 = vmatpush1.msra.mxu0 0.0
    %480 = vmatprep.subr.mxu0 0.0
    %481 = vmatpush1.msra.mxu0 0.0
    %482 = vmatprep.subr.mxu0 0.0
    %483 = vmatpush1.msra.mxu0 0.0
    %484 = vmatprep.subr.mxu0 0.0
    %485 = vmatpush1.msra.mxu0 0.0
    %486 = vmatprep.subr.mxu0 0.0
    %487 = vmatpush1.msra.mxu0 0.0
    %488 = vmatprep.subr.mxu0 0.0
    %489 = vmatpush1.msra.mxu0 0.0
    %490 = vmatprep.subr.mxu0 0.0
    %491 = vmatpush1.msra.mxu0 0.0
    %492 = vmatprep.subr.mxu0 0.0
    %493 = vmatpush1.msra.mxu0 0.0
    %494 = vmatprep.subr.mxu0 0.0
    %495 = vmatpush1.msra.mxu0 0.0
    %496 = vmatprep.subr.mxu0 0.0
    %497 = vmatpush1.msra.mxu0 0.0
    %498 = vmatprep.subr.mxu0 0.0
    %499 = vmatpush1.msra.mxu0 0.0
    %500 = vmatprep.subr.mxu0 0.0
    %501 = vmatpush1.msra.mxu0 0.0
    %502 = vmatprep.subr.mxu0 0.0
    %503 = vmatpush1.msra.mxu0 0.0
    %504 = vmatprep.subr.mxu0 0.0
    %505 = vmatpush1.msra.mxu0 0.0
    %506 = vmatprep.subr.mxu0 0.0
    %507 = vmatpush1.msra.mxu0 0.0
    %508 = vmatprep.subr.mxu0 0.0
    %509 = vmatpush1.msra.mxu0 0.0
    %510 = vmatprep.subr.mxu0 0.0
    %511 = vmatpush1.msra.mxu0 0.0
    %512 = vmatprep.subr.mxu0 0.0
    %513 = vmatpush1.msra.mxu0 0.0
    %514 = vmatprep.subr.mxu0 0.0
    %515 = vmatpush1.msra.mxu0 0.0
    %516 = vmatprep.subr.mxu0 0.0
    %517 = vmatpush1.msra.mxu0 0.0
    %518 = vmatprep.subr.mxu0 0.0
    %519 = vmatpush1.msra.mxu0 0.0
    %520 = vmatprep.subr.mxu0 0.0
    %521 = vmatpush1.msra.mxu0 0.0
    %522 = vmatprep.subr.mxu0 0.0
    %523 = vmatpush1.msra.mxu0 0.0
    %524 = vmatprep.subr.mxu0 0.0
    %525 = vmatpush1.msra.mxu0 0.0
    %526 = vmatprep.subr.mxu0 0.0
    %527 = vmatpush1.msra.mxu0 0.0
    %528 = vmatprep.subr.mxu0 0.0
    %529 = vmatpush1.msra.mxu0 0.0
    %530 = vmatprep.subr.mxu0 0.0
    %531 = vmatpush1.msra.mxu0 0.0
    %532 = vmatprep.subr.mxu0 0.0
    %533 = vmatpush1.msra.mxu0 0.0
    %534 = vmatprep.subr.mxu0 0.0
    %535 = vmatpush1.msra.mxu0 0.0
    %536 = vmatprep.subr.mxu0 0.0
    %537 = vmatpush1.msra.mxu0 0.0
    %538 = vmatprep.mubr.f32.mxu0 0.0
    %539 = vmatmul.mubr.f32.gmra.mrb[0].mxu0 %v330
    %v540 = vpop.f32.mrb[0].mxu0
    %v541 = vadd.f32 0.0, %v540
    %v542 = vpop.f32.mrb[0].mxu0
    %543 = vdwg.mxu0
    %544 = vmatprep.subr.mxu0 0.0
    %545 = vmatpush1.msra.mxu0 1.0
    %546 = vmatprep.subr.mxu0 0.0
    %547 = vmatpush1.msra.mxu0 0.0
    %548 = vmatprep.subr.mxu0 0.0
    %549 = vmatpush1.msra.mxu0 0.0
    %550 = vmatprep.subr.mxu0 0.0
    %551 = vmatpush1.msra.mxu0 0.0
    %552 = vmatprep.subr.mxu0 0.0
    %553 = vmatpush1.msra.mxu0 0.0
    %554 = vmatprep.subr.mxu0 0.0
    %555 = vmatpush1.msra.mxu0 0.0
    %556 = vmatprep.subr.mxu0 0.0
    %557 = vmatpush1.msra.mxu0 0.0
    %558 = vmatprep.subr.mxu0 0.0
    %559 = vmatpush1.msra.mxu0 0.0
    %560 = vmatprep.subr.mxu0 0.0
    %561 = vmatpush1.msra.mxu0 0.0
    %562 = vmatprep.subr.mxu0 0.0
    %563 = vmatpush1.msra.mxu0 0.0
    %564 = vmatprep.subr.mxu0 0.0
    %565 = vmatpush1.msra.mxu0 0.0
    %566 = vmatprep.subr.mxu0 0.0
    %567 = vmatpush1.msra.mxu0 0.0
    %568 = vmatprep.subr.mxu0 0.0
    %569 = vmatpush1.msra.mxu0 0.0
    %570 = vmatprep.subr.mxu0 0.0
    %571 = vmatpush1.msra.mxu0 0.0
    %572 = vmatprep.subr.mxu0 0.0
    %573 = vmatpush1.msra.mxu0 0.0
    %574 = vmatprep.subr.mxu0 0.0
    %575 = vmatpush1.msra.mxu0 0.0
    %576 = vmatprep.subr.mxu0 0.0
    %577 = vmatpush1.msra.mxu0 0.0
    %578 = vmatprep.subr.mxu0 0.0
    %579 = vmatpush1.msra.mxu0 0.0
    %580 = vmatprep.subr.mxu0 0.0
    %581 = vmatpush1.msra.mxu0 0.0
    %582 = vmatprep.subr.mxu0 0.0
    %583 = vmatpush1.msra.mxu0 0.0
    %584 = vmatprep.subr.mxu0 0.0
    %585 = vmatpush1.msra.mxu0 0.0
    %586 = vmatprep.subr.mxu0 0.0
    %587 = vmatpush1.msra.mxu0 0.0
    %588 = vmatprep.subr.mxu0 0.0
    %589 = vmatpush1.msra.mxu0 0.0
    %590 = vmatprep.subr.mxu0 0.0
    %591 = vmatpush1.msra.mxu0 0.0
    %592 = vmatprep.subr.mxu0 0.0
    %593 = vmatpush1.msra.mxu0 0.0
    %594 = vmatprep.subr.mxu0 0.0
    %595 = vmatpush1.msra.mxu0 0.0
    %596 = vmatprep.subr.mxu0 0.0
    %597 = vmatpush1.msra.mxu0 0.0
    %598 = vmatprep.subr.mxu0 0.0
    %599 = vmatpush1.msra.mxu0 0.0
    %600 = vmatprep.subr.mxu0 0.0
    %601 = vmatpush1.msra.mxu0 0.0
    %602 = vmatprep.subr.mxu0 0.0
    %603 = vmatpush1.msra.mxu0 0.0
    %604 = vmatprep.subr.mxu0 0.0
    %605 = vmatpush1.msra.mxu0 0.0
    %606 = vmatprep.subr.mxu0 0.0
    %607 = vmatpush1.msra.mxu0 0.0
    %608 = vmatprep.mubr.f32.mxu0 0.0
    %609 = vmatmul.mubr.f32.gmra.mrb[0].mxu0 %v225
    %v610 = vpop.f32.mrb[0].mxu0
    %v611 = vadd.f32 0.0, %v610
    %v612 = vpop.f32.mrb[0].mxu0
    %613 = vdwg.mxu0
    %614 = vmatprep.subr.mxu0 0.0
    %615 = vmatpush1.msra.mxu0 1.0
    %616 = vmatprep.subr.mxu0 0.0
    %617 = vmatpush1.msra.mxu0 0.0
    %618 = vmatprep.subr.mxu0 0.0
    %619 = vmatpush1.msra.mxu0 0.0
    %620 = vmatprep.subr.mxu0 0.0
    %621 = vmatpush1.msra.mxu0 0.0
    %622 = vmatprep.subr.mxu0 0.0
    %623 = vmatpush1.msra.mxu0 0.0
    %624 = vmatprep.subr.mxu0 0.0
    %625 = vmatpush1.msra.mxu0 0.0
    %626 = vmatprep.subr.mxu0 0.0
    %627 = vmatpush1.msra.mxu0 0.0
    %628 = vmatprep.subr.mxu0 0.0
    %629 = vmatpush1.msra.mxu0 0.0
    %630 = vmatprep.subr.mxu0 0.0
    %631 = vmatpush1.msra.mxu0 0.0
    %632 = vmatprep.subr.mxu0 0.0
    %633 = vmatpush1.msra.mxu0 0.0
    %634 = vmatprep.subr.mxu0 0.0
    %635 = vmatpush1.msra.mxu0 0.0
    %636 = vmatprep.subr.mxu0 0.0
    %637 = vmatpush1.msra.mxu0 0.0
    %638 = vmatprep.subr.mxu0 0.0
    %639 = vmatpush1.msra.mxu0 0.0
    %640 = vmatprep.subr.mxu0 0.0
    %641 = vmatpush1.msra.mxu0 0.0
    %642 = vmatprep.subr.mxu0 0.0
    %643 = vmatpush1.msra.mxu0 0.0
    %644 = vmatprep.subr.mxu0 0.0
    %645 = vmatpush1.msra.mxu0 0.0
    %646 = vmatprep.subr.mxu0 0.0
    %647 = vmatpush1.msra.mxu0 0.0
    %648 = vmatprep.subr.mxu0 0.0
    %649 = vmatpush1.msra.mxu0 0.0
    %650 = vmatprep.subr.mxu0 0.0
    %651 = vmatpush1.msra.mxu0 0.0
    %652 = vmatprep.subr.mxu0 0.0
    %653 = vmatpush1.msra.mxu0 0.0
    %654 = vmatprep.subr.mxu0 0.0
    %655 = vmatpush1.msra.mxu0 0.0
    %656 = vmatprep.subr.mxu0 0.0
    %657 = vmatpush1.msra.mxu0 0.0
    %658 = vmatprep.subr.mxu0 0.0
    %659 = vmatpush1.msra.mxu0 0.0
    %660 = vmatprep.subr.mxu0 0.0
    %661 = vmatpush1.msra.mxu0 0.0
    %662 = vmatprep.subr.mxu0 0.0
    %663 = vmatpush1.msra.mxu0 0.0
    %664 = vmatprep.subr.mxu0 0.0
    %665 = vmatpush1.msra.mxu0 0.0
    %666 = vmatprep.subr.mxu0 0.0
    %667 = vmatpush1.msra.mxu0 0.0
    %668 = vmatprep.subr.mxu0 0.0
    %669 = vmatpush1.msra.mxu0 0.0
    %670 = vmatprep.subr.mxu0 0.0
    %671 = vmatpush1.msra.mxu0 0.0
    %672 = vmatprep.subr.mxu0 0.0
    %673 = vmatpush1.msra.mxu0 0.0
    %674 = vmatprep.subr.mxu0 0.0
    %675 = vmatpush1.msra.mxu0 0.0
    %676 = vmatprep.subr.mxu0 0.0
    %677 = vmatpush1.msra.mxu0 0.0
    %678 = vmatprep.mubr.f32.mxu0 0.0
    %679 = vmatmul.mubr.f32.gmra.mrb[0].mxu0 %v330
    %v680 = vpop.f32.mrb[0].mxu0
    %v681 = vadd.f32 0.0, %v680
    %v682 = vpop.f32.mrb[0].mxu0
    %683 = vdwg.mxu0
    %v684 = vmul.f32 %v611, %v187
    %v685 = vmul.f32 %v681, %v187
    %v686 = vadd.f32 %v684, %v471
    %v687 = vadd.f32 %v685, %v541
    %v688 = vmul.f32 %v294, 2.0
    %v689 = vmul.f32 %v399, 2.0
    %v690 = vmul.f32 %v688, %v185
    %v691 = vmul.f32 %v689, %v185
    %v692 = vsub.f32 %v686, %v690
    %v693 = vsub.f32 %v687, %v691
    %v694 = vmul.f32 %v692, %v191
    %v695 = vmul.f32 %v693, %v191
    %v696 = vsub.f32 %v694, %v611
    %v697 = vsub.f32 %v695, %v681
    %v698 = vmul.f32 %v696, %v696
    %v699 = vmul.f32 %v697, %v697
    %vm700 = vcmask 261120
    %v701 = vsel %vm700, %v698, 0.0
    %702 = vadd.xlane.f32.xlu0 %v701
    %v703 = vpop.xlane.xlu0 %702
    %v704 = vsel %vm700, %v699, 0.0
    %705 = vadd.xlane.f32.xlu0 %v704
    %v706 = vpop.xlane.xlu0 %705
    %v707 = vrot.slane %v703, 4
    %v708 = vadd.f32 %v703, %v707
    %v709 = vrot.slane %v708, 2
    %v710 = vadd.f32 %v708, %v709
    %v711 = vrot.slane %v710, 1
    %v712 = vadd.f32 %v710, %v711
    %v713 = vrot.slane %v706, 4
    %v714 = vadd.f32 %v706, %v713
    %v715 = vrot.slane %v714, 2
    %v716 = vadd.f32 %v714, %v715
    %v717 = vrot.slane %v716, 1
    %v718 = vadd.f32 %v716, %v717
    %v719 = vmax.f32 %v712, 1e-24
    %v720 = vmax.f32 %v718, 1e-24
    %v721 = vrsqrt.pop %v719
    %v722 = vrsqrt.pop %v720
    %v723 = vmul.f32 %v696, %v721
    %v724 = vmul.f32 %v697, %v722
    %v725 = vmul.f32 %v611, %v185
    %v726 = vmul.f32 %v681, %v185
    %v727 = vsub.f32 %v294, %v725
    %v728 = vsub.f32 %v399, %v726
    %v729 = vmul.f32 %v727, %v189
    %v730 = vmul.f32 %v728, %v189
    %v731 = vmul.f32 %v729, %v729
    %v732 = vmul.f32 %v730, %v730
    %v733 = vsel %vm700, %v731, 0.0
    %734 = vadd.xlane.f32.xlu0 %v733
    %v735 = vpop.xlane.xlu0 %734
    %v736 = vsel %vm700, %v732, 0.0
    %737 = vadd.xlane.f32.xlu0 %v736
    %v738 = vpop.xlane.xlu0 %737
    %v739 = vmax.f32 %v735, 1e-24
    %v740 = vmax.f32 %v738, 1e-24
    %v741 = vrsqrt.pop %v739
    %v742 = vrsqrt.pop %v740
    %v743 = vmul.f32 %v729, %v741
    %v744 = vmul.f32 %v730, %v742
    %v745 = vmul.f32 %v743, %v743
    %v746 = vmul.f32 %v744, %v744
    %v747 = vsel %vm700, %v745, 0.0
    %748 = vadd.xlane.f32.xlu0 %v747
    %v749 = vpop.xlane.xlu0 %748
    %v750 = vsel %vm700, %v746, 0.0
    %751 = vadd.xlane.f32.xlu0 %v750
    %v752 = vpop.xlane.xlu0 %751
    %v753 = vrot.slane %v749, 4
    %v754 = vadd.f32 %v749, %v753
    %v755 = vrot.slane %v754, 2
    %v756 = vadd.f32 %v754, %v755
    %v757 = vrot.slane %v756, 1
    %v758 = vadd.f32 %v756, %v757
    %v759 = vrot.slane %v752, 4
    %v760 = vadd.f32 %v752, %v759
    %v761 = vrot.slane %v760, 2
    %v762 = vadd.f32 %v760, %v761
    %v763 = vrot.slane %v762, 1
    %v764 = vadd.f32 %v762, %v763
    %v765 = vmax.f32 %v758, 1e-24
    %v766 = vmax.f32 %v764, 1e-24
    %v767 = vrsqrt.pop %v765
    %v768 = vrsqrt.pop %v766
    %v769 = vmul.f32 %v743, %v767
    %v770 = vmul.f32 %v744, %v768
    %v771 = vcombine.high %v769, 0.0
    %v773 = vunpack.c.l.s4 1983009808
    %v774 = vunpack.c.0.s8 %v773
    %v775 = vlaneseq
    %v776 = vshrl.u32 %v775, 7
    %v777 = vsub.s32 %v774, %v776
    %v778 = vrot.slane %v769, %v777
    %v780 = vunpack.c.l.s4 1983009808
    %v781 = vunpack.c.0.s8 %v780
    %v782 = vlaneseq
    %v783 = vshrl.u32 %v782, 7
    %v784 = vsub.s32 %v781, %v783
    %v785 = vrot.slane %v771, %v784
    %v786 = vcombine.high %v770, 0.0
    %v788 = vunpack.c.l.s4 1983009808
    %v789 = vunpack.c.0.s8 %v788
    %v790 = vlaneseq
    %v791 = vshrl.u32 %v790, 7
    %v792 = vsub.s32 %v789, %v791
    %v793 = vrot.slane %v770, %v792
    %v795 = vunpack.c.l.s4 1983009808
    %v796 = vunpack.c.0.s8 %v795
    %v797 = vlaneseq
    %v798 = vshrl.u32 %v797, 7
    %v799 = vsub.s32 %v796, %v798
    %v800 = vrot.slane %v786, %v799
    %v801 = vcombine.low %v778, %v793
    %v802 = vcombine.high %v778, %v793
    %v804 = vunpack.c.l.s4 1934713408
    %v805 = vunpack.c.0.s8 %v804
    %v806 = vlaneseq
    %v807 = vshrl.u32 %v806, 7
    %v808 = vsub.s32 %v805, %v807
    %v809 = vrot.slane %v801, %v808
    %v811 = vunpack.c.l.s4 1934713408
    %v812 = vunpack.c.0.s8 %v811
    %v813 = vlaneseq
    %v814 = vshrl.u32 %v813, 7
    %v815 = vsub.s32 %v812, %v814
    %v816 = vrot.slane %v802, %v815
    %v817 = vcombine.low %v785, %v800
    %v818 = vcombine.high %v785, %v800
    %v820 = vunpack.c.l.s4 1934713408
    %v821 = vunpack.c.0.s8 %v820
    %v822 = vlaneseq
    %v823 = vshrl.u32 %v822, 7
    %v824 = vsub.s32 %v821, %v823
    %v825 = vrot.slane %v817, %v824
    %v827 = vunpack.c.l.s4 1934713408
    %v828 = vunpack.c.0.s8 %v827
    %v829 = vlaneseq
    %v830 = vshrl.u32 %v829, 7
    %v831 = vsub.s32 %v828, %v830
    %v832 = vrot.slane %v818, %v831
    %v833 = vcombine.high %v809, 0.0
    %v834 = vcombine.high %v816, 0.0
    %v835 = vcombine.high %v825, 0.0
    %v836 = vcombine.high %v832, 0.0
    %838 = vrot.lane.b32.xlu0 %v833, 32
    %v839 = vpop.permute.xlu0 %838
    %842 = vrot.lane.b32.xlu0 %v816, 64
    %v843 = vpop.permute.xlu0 %842
    %846 = vrot.lane.b32.xlu0 %v834, 96
    %v847 = vpop.permute.xlu0 %846
    %850 = vrot.lane.b32.xlu0 %v835, 32
    %v851 = vpop.permute.xlu0 %850
    %854 = vrot.lane.b32.xlu0 %v832, 64
    %v855 = vpop.permute.xlu0 %854
    %858 = vrot.lane.b32.xlu0 %v836, 96
    %v859 = vpop.permute.xlu0 %858
    %v861 = vsel %vm700, %v809, %v839
    %vm862 = vcmask 523264
    %v863 = vsel %vm862, %v861, %v843
    %vm864 = vcmask 785408
    %v865 = vsel %vm864, %v863, %v847
    %v866 = vsel %vm700, %v825, %v851
    %v867 = vsel %vm862, %v866, %v855
    %v868 = vsel %vm864, %v867, %v859
    %v869 = vcombine.high %v723, 0.0
    %v871 = vunpack.c.l.s4 1983009808
    %v872 = vunpack.c.0.s8 %v871
    %v873 = vlaneseq
    %v874 = vshrl.u32 %v873, 7
    %v875 = vsub.s32 %v872, %v874
    %v876 = vrot.slane %v723, %v875
    %v878 = vunpack.c.l.s4 1983009808
    %v879 = vunpack.c.0.s8 %v878
    %v880 = vlaneseq
    %v881 = vshrl.u32 %v880, 7
    %v882 = vsub.s32 %v879, %v881
    %v883 = vrot.slane %v869, %v882
    %v884 = vcombine.high %v724, 0.0
    %v886 = vunpack.c.l.s4 1983009808
    %v887 = vunpack.c.0.s8 %v886
    %v888 = vlaneseq
    %v889 = vshrl.u32 %v888, 7
    %v890 = vsub.s32 %v887, %v889
    %v891 = vrot.slane %v724, %v890
    %v893 = vunpack.c.l.s4 1983009808
    %v894 = vunpack.c.0.s8 %v893
    %v895 = vlaneseq
    %v896 = vshrl.u32 %v895, 7
    %v897 = vsub.s32 %v894, %v896
    %v898 = vrot.slane %v884, %v897
    %v899 = vcombine.low %v876, %v891
    %v900 = vcombine.high %v876, %v891
    %v902 = vunpack.c.l.s4 1934713408
    %v903 = vunpack.c.0.s8 %v902
    %v904 = vlaneseq
    %v905 = vshrl.u32 %v904, 7
    %v906 = vsub.s32 %v903, %v905
    %v907 = vrot.slane %v899, %v906
    %v909 = vunpack.c.l.s4 1934713408
    %v910 = vunpack.c.0.s8 %v909
    %v911 = vlaneseq
    %v912 = vshrl.u32 %v911, 7
    %v913 = vsub.s32 %v910, %v912
    %v914 = vrot.slane %v900, %v913
    %v915 = vcombine.low %v883, %v898
    %v916 = vcombine.high %v883, %v898
    %v918 = vunpack.c.l.s4 1934713408
    %v919 = vunpack.c.0.s8 %v918
    %v920 = vlaneseq
    %v921 = vshrl.u32 %v920, 7
    %v922 = vsub.s32 %v919, %v921
    %v923 = vrot.slane %v915, %v922
    %v925 = vunpack.c.l.s4 1934713408
    %v926 = vunpack.c.0.s8 %v925
    %v927 = vlaneseq
    %v928 = vshrl.u32 %v927, 7
    %v929 = vsub.s32 %v926, %v928
    %v930 = vrot.slane %v916, %v929
    %v931 = vcombine.high %v907, 0.0
    %v932 = vcombine.high %v914, 0.0
    %v933 = vcombine.high %v923, 0.0
    %v934 = vcombine.high %v930, 0.0
    %936 = vrot.lane.b32.xlu0 %v931, 32
    %v937 = vpop.permute.xlu0 %936
    %940 = vrot.lane.b32.xlu0 %v914, 64
    %v941 = vpop.permute.xlu0 %940
    %944 = vrot.lane.b32.xlu0 %v932, 96
    %v945 = vpop.permute.xlu0 %944
    %948 = vrot.lane.b32.xlu0 %v933, 32
    %v949 = vpop.permute.xlu0 %948
    %952 = vrot.lane.b32.xlu0 %v930, 64
    %v953 = vpop.permute.xlu0 %952
    %956 = vrot.lane.b32.xlu0 %v934, 96
    %v957 = vpop.permute.xlu0 %956
    %v959 = vsel %vm700, %v907, %v937
    %v960 = vsel %vm862, %v959, %v941
    %v961 = vsel %vm864, %v960, %v945
    %v962 = vsel %vm700, %v923, %v949
    %v963 = vsel %vm862, %v962, %v953
    %v964 = vsel %vm864, %v963, %v957
    %v965 = vld [vmem:[%s4] sm:$0xf]
    %s966 = scalar_lea.vmem %s4, 4
    %v967 = vld [vmem:[%s966] sm:$0xf]
    %s968 = scalar_lea.vmem %s4, 8
    %v969 = vld [vmem:[%s968] sm:$0xf]
    %s970 = scalar_lea.vmem %s4, 12
    %v971 = vld [vmem:[%s970] sm:$0xf]
    %973 = vrot.lane.b32.xlu0 %v183, 120
    %v974 = vpop.permute.xlu0 %973
    %976 = vxpose.xlu0.b32.start [1/16] %v974, 128
    %977 = vxpose.xlu0.b32.cont [2/16] 0.0, 128
    %978 = vxpose.xlu0.b32.cont [3/16] 0.0, 128
    %979 = vxpose.xlu0.b32.cont [4/16] 0.0, 128
    %980 = vxpose.xlu0.b32.cont [5/16] 0.0, 128
    %981 = vxpose.xlu0.b32.cont [6/16] 0.0, 128
    %982 = vxpose.xlu0.b32.cont [7/16] 0.0, 128
    %983 = vxpose.xlu0.b32.cont [8/16] 0.0, 128
    %984 = vxpose.xlu0.b32.cont [9/16] 0.0, 128
    %985 = vxpose.xlu0.b32.cont [10/16] 0.0, 128
    %986 = vxpose.xlu0.b32.cont [11/16] 0.0, 128
    %987 = vxpose.xlu0.b32.cont [12/16] 0.0, 128
    %988 = vxpose.xlu0.b32.cont [13/16] 0.0, 128
    %989 = vxpose.xlu0.b32.cont [14/16] 0.0, 128
    %990 = vxpose.xlu0.b32.cont [15/16] 0.0, 128
    %991 = vxpose.xlu0.b32.end [16/16] 0.0, 128
    %v992 = vpop.trf.xlu0
    %v993 = vpop.trf.xlu0
    %v994 = vpop.trf.xlu0
    %v995 = vpop.trf.xlu0
    %v996 = vpop.trf.xlu0
    %v997 = vpop.trf.xlu0
    %v998 = vpop.trf.xlu0
    %v999 = vpop.trf.xlu0
    %v1000 = vpop.trf.xlu0
    %v1001 = vpop.trf.xlu0
    %v1002 = vpop.trf.xlu0
    %v1003 = vpop.trf.xlu0
    %v1004 = vpop.trf.xlu0
    %v1005 = vpop.trf.xlu0
    %v1006 = vpop.trf.xlu0
    %v1007 = vpop.trf.xlu0
    %1008 = vrot.lane.b32.xlu0 %v39, 96
    %v1009 = vpop.permute.xlu0 %1008
    %v1012 = vsel %vm130, %v992, 0
    %1014 = vmatprep.subr.mxu0 0.0
    %1015 = vmatpush1.msra.mxu0 %v1009
    %1016 = vmatprep.subr.mxu0 0.0
    %1017 = vmatpush1.msra.mxu0 0.0
    %1018 = vmatprep.subr.mxu0 0.0
    %1019 = vmatpush1.msra.mxu0 0.0
    %1020 = vmatprep.subr.mxu0 0.0
    %1021 = vmatpush1.msra.mxu0 0.0
    %1022 = vmatprep.subr.mxu0 0.0
    %1023 = vmatpush1.msra.mxu0 0.0
    %1024 = vmatprep.subr.mxu0 0.0
    %1025 = vmatpush1.msra.mxu0 0.0
    %1026 = vmatprep.subr.mxu0 0.0
    %1027 = vmatpush1.msra.mxu0 0.0
    %1028 = vmatprep.subr.mxu0 0.0
    %1029 = vmatpush1.msra.mxu0 0.0
    %1030 = vmatprep.subr.mxu0 0.0
    %1031 = vmatpush1.msra.mxu0 0.0
    %1032 = vmatprep.subr.mxu0 0.0
    %1033 = vmatpush1.msra.mxu0 0.0
    %1034 = vmatprep.subr.mxu0 0.0
    %1035 = vmatpush1.msra.mxu0 0.0
    %1036 = vmatprep.subr.mxu0 0.0
    %1037 = vmatpush1.msra.mxu0 0.0
    %1038 = vmatprep.subr.mxu0 0.0
    %1039 = vmatpush1.msra.mxu0 0.0
    %1040 = vmatprep.subr.mxu0 0.0
    %1041 = vmatpush1.msra.mxu0 0.0
    %1042 = vmatprep.subr.mxu0 0.0
    %1043 = vmatpush1.msra.mxu0 0.0
    %1044 = vmatprep.subr.mxu0 0.0
    %1045 = vmatpush1.msra.mxu0 0.0
    %1046 = vmatprep.subr.mxu0 0.0
    %1047 = vmatpush1.msra.mxu0 0.0
    %1048 = vmatprep.subr.mxu0 0.0
    %1049 = vmatpush1.msra.mxu0 0.0
    %1050 = vmatprep.subr.mxu0 0.0
    %1051 = vmatpush1.msra.mxu0 0.0
    %1052 = vmatprep.subr.mxu0 0.0
    %1053 = vmatpush1.msra.mxu0 0.0
    %1054 = vmatprep.subr.mxu0 0.0
    %1055 = vmatpush1.msra.mxu0 0.0
    %1056 = vmatprep.subr.mxu0 0.0
    %1057 = vmatpush1.msra.mxu0 0.0
    %1058 = vmatprep.subr.mxu0 0.0
    %1059 = vmatpush1.msra.mxu0 0.0
    %1060 = vmatprep.subr.mxu0 0.0
    %1061 = vmatpush1.msra.mxu0 0.0
    %1062 = vmatprep.subr.mxu0 0.0
    %1063 = vmatpush1.msra.mxu0 0.0
    %1064 = vmatprep.subr.mxu0 0.0
    %1065 = vmatpush1.msra.mxu0 0.0
    %1066 = vmatprep.subr.mxu0 0.0
    %1067 = vmatpush1.msra.mxu0 0.0
    %1068 = vmatprep.subr.mxu0 0.0
    %1069 = vmatpush1.msra.mxu0 0.0
    %1070 = vmatprep.subr.mxu0 0.0
    %1071 = vmatpush1.msra.mxu0 0.0
    %1072 = vmatprep.subr.mxu0 0.0
    %1073 = vmatpush1.msra.mxu0 0.0
    %1074 = vmatprep.subr.mxu0 0.0
    %1075 = vmatpush1.msra.mxu0 0.0
    %1076 = vmatprep.subr.mxu0 0.0
    %1077 = vmatpush1.msra.mxu0 0.0
    %1078 = vmatprep.mubr.f32.mxu0 0.0
    %1079 = vmatmul.mubr.f32.gmra.mrb[0].mxu0 %v1012
    %v1080 = vpop.f32.mrb[0].mxu0
    %v1081 = vadd.f32 0.0, %v1080
    %v1082 = vpop.f32.mrb[0].mxu0
    %1083 = vdwg.mxu0
    %1085 = vrot.lane.b32.xlu0 %v184, 120
    %v1086 = vpop.permute.xlu0 %1085
    %1088 = vxpose.xlu0.b32.start [1/16] %v1086, 128
    %1089 = vxpose.xlu0.b32.cont [2/16] 0.0, 128
    %1090 = vxpose.xlu0.b32.cont [3/16] 0.0, 128
    %1091 = vxpose.xlu0.b32.cont [4/16] 0.0, 128
    %1092 = vxpose.xlu0.b32.cont [5/16] 0.0, 128
    %1093 = vxpose.xlu0.b32.cont [6/16] 0.0, 128
    %1094 = vxpose.xlu0.b32.cont [7/16] 0.0, 128
    %1095 = vxpose.xlu0.b32.cont [8/16] 0.0, 128
    %1096 = vxpose.xlu0.b32.cont [9/16] 0.0, 128
    %1097 = vxpose.xlu0.b32.cont [10/16] 0.0, 128
    %1098 = vxpose.xlu0.b32.cont [11/16] 0.0, 128
    %1099 = vxpose.xlu0.b32.cont [12/16] 0.0, 128
    %1100 = vxpose.xlu0.b32.cont [13/16] 0.0, 128
    %1101 = vxpose.xlu0.b32.cont [14/16] 0.0, 128
    %1102 = vxpose.xlu0.b32.cont [15/16] 0.0, 128
    %1103 = vxpose.xlu0.b32.end [16/16] 0.0, 128
    %v1104 = vpop.trf.xlu0
    %v1105 = vpop.trf.xlu0
    %v1106 = vpop.trf.xlu0
    %v1107 = vpop.trf.xlu0
    %v1108 = vpop.trf.xlu0
    %v1109 = vpop.trf.xlu0
    %v1110 = vpop.trf.xlu0
    %v1111 = vpop.trf.xlu0
    %v1112 = vpop.trf.xlu0
    %v1113 = vpop.trf.xlu0
    %v1114 = vpop.trf.xlu0
    %v1115 = vpop.trf.xlu0
    %v1116 = vpop.trf.xlu0
    %v1117 = vpop.trf.xlu0
    %v1118 = vpop.trf.xlu0
    %v1119 = vpop.trf.xlu0
    %1120 = vrot.lane.b32.xlu0 %v40, 96
    %v1121 = vpop.permute.xlu0 %1120
    %v1124 = vsel %vm130, %v1104, 0
    %1126 = vmatprep.subr.mxu0 0.0
    %1127 = vmatpush1.msra.mxu0 %v1121
    %1128 = vmatprep.subr.mxu0 0.0
    %1129 = vmatpush1.msra.mxu0 0.0
    %1130 = vmatprep.subr.mxu0 0.0
    %1131 = vmatpush1.msra.mxu0 0.0
    %1132 = vmatprep.subr.mxu0 0.0
    %1133 = vmatpush1.msra.mxu0 0.0
    %1134 = vmatprep.subr.mxu0 0.0
    %1135 = vmatpush1.msra.mxu0 0.0
    %1136 = vmatprep.subr.mxu0 0.0
    %1137 = vmatpush1.msra.mxu0 0.0
    %1138 = vmatprep.subr.mxu0 0.0
    %1139 = vmatpush1.msra.mxu0 0.0
    %1140 = vmatprep.subr.mxu0 0.0
    %1141 = vmatpush1.msra.mxu0 0.0
    %1142 = vmatprep.subr.mxu0 0.0
    %1143 = vmatpush1.msra.mxu0 0.0
    %1144 = vmatprep.subr.mxu0 0.0
    %1145 = vmatpush1.msra.mxu0 0.0
    %1146 = vmatprep.subr.mxu0 0.0
    %1147 = vmatpush1.msra.mxu0 0.0
    %1148 = vmatprep.subr.mxu0 0.0
    %1149 = vmatpush1.msra.mxu0 0.0
    %1150 = vmatprep.subr.mxu0 0.0
    %1151 = vmatpush1.msra.mxu0 0.0
    %1152 = vmatprep.subr.mxu0 0.0
    %1153 = vmatpush1.msra.mxu0 0.0
    %1154 = vmatprep.subr.mxu0 0.0
    %1155 = vmatpush1.msra.mxu0 0.0
    %1156 = vmatprep.subr.mxu0 0.0
    %1157 = vmatpush1.msra.mxu0 0.0
    %1158 = vmatprep.subr.mxu0 0.0
    %1159 = vmatpush1.msra.mxu0 0.0
    %1160 = vmatprep.subr.mxu0 0.0
    %1161 = vmatpush1.msra.mxu0 0.0
    %1162 = vmatprep.subr.mxu0 0.0
    %1163 = vmatpush1.msra.mxu0 0.0
    %1164 = vmatprep.subr.mxu0 0.0
    %1165 = vmatpush1.msra.mxu0 0.0
    %1166 = vmatprep.subr.mxu0 0.0
    %1167 = vmatpush1.msra.mxu0 0.0
    %1168 = vmatprep.subr.mxu0 0.0
    %1169 = vmatpush1.msra.mxu0 0.0
    %1170 = vmatprep.subr.mxu0 0.0
    %1171 = vmatpush1.msra.mxu0 0.0
    %1172 = vmatprep.subr.mxu0 0.0
    %1173 = vmatpush1.msra.mxu0 0.0
    %1174 = vmatprep.subr.mxu0 0.0
    %1175 = vmatpush1.msra.mxu0 0.0
    %1176 = vmatprep.subr.mxu0 0.0
    %1177 = vmatpush1.msra.mxu0 0.0
    %1178 = vmatprep.subr.mxu0 0.0
    %1179 = vmatpush1.msra.mxu0 0.0
    %1180 = vmatprep.subr.mxu0 0.0
    %1181 = vmatpush1.msra.mxu0 0.0
    %1182 = vmatprep.subr.mxu0 0.0
    %1183 = vmatpush1.msra.mxu0 0.0
    %1184 = vmatprep.subr.mxu0 0.0
    %1185 = vmatpush1.msra.mxu0 0.0
    %1186 = vmatprep.subr.mxu0 0.0
    %1187 = vmatpush1.msra.mxu0 0.0
    %1188 = vmatprep.subr.mxu0 0.0
    %1189 = vmatpush1.msra.mxu0 0.0
    %1190 = vmatprep.mubr.f32.mxu0 0.0
    %1191 = vmatmul.mubr.f32.gmra.mrb[0].mxu0 %v1124
    %v1192 = vpop.f32.mrb[0].mxu0
    %v1193 = vadd.f32 0.0, %v1192
    %v1194 = vpop.f32.mrb[0].mxu0
    %1195 = vdwg.mxu0
    %1197 = vrot.lane.b32.xlu0 %v402, 96
    %v1198 = vpop.permute.xlu0 %1197
    %1200 = vmatprep.subr.mxu0 0.0
    %1201 = vmatpush1.msra.mxu0 %v1198
    %1202 = vmatprep.subr.mxu0 0.0
    %1203 = vmatpush1.msra.mxu0 0.0
    %1204 = vmatprep.subr.mxu0 0.0
    %1205 = vmatpush1.msra.mxu0 0.0
    %1206 = vmatprep.subr.mxu0 0.0
    %1207 = vmatpush1.msra.mxu0 0.0
    %1208 = vmatprep.subr.mxu0 0.0
    %1209 = vmatpush1.msra.mxu0 0.0
    %1210 = vmatprep.subr.mxu0 0.0
    %1211 = vmatpush1.msra.mxu0 0.0
    %1212 = vmatprep.subr.mxu0 0.0
    %1213 = vmatpush1.msra.mxu0 0.0
    %1214 = vmatprep.subr.mxu0 0.0
    %1215 = vmatpush1.msra.mxu0 0.0
    %1216 = vmatprep.subr.mxu0 0.0
    %1217 = vmatpush1.msra.mxu0 0.0
    %1218 = vmatprep.subr.mxu0 0.0
    %1219 = vmatpush1.msra.mxu0 0.0
    %1220 = vmatprep.subr.mxu0 0.0
    %1221 = vmatpush1.msra.mxu0 0.0
    %1222 = vmatprep.subr.mxu0 0.0
    %1223 = vmatpush1.msra.mxu0 0.0
    %1224 = vmatprep.subr.mxu0 0.0
    %1225 = vmatpush1.msra.mxu0 0.0
    %1226 = vmatprep.subr.mxu0 0.0
    %1227 = vmatpush1.msra.mxu0 0.0
    %1228 = vmatprep.subr.mxu0 0.0
    %1229 = vmatpush1.msra.mxu0 0.0
    %1230 = vmatprep.subr.mxu0 0.0
    %1231 = vmatpush1.msra.mxu0 0.0
    %1232 = vmatprep.subr.mxu0 0.0
    %1233 = vmatpush1.msra.mxu0 0.0
    %1234 = vmatprep.subr.mxu0 0.0
    %1235 = vmatpush1.msra.mxu0 0.0
    %1236 = vmatprep.subr.mxu0 0.0
    %1237 = vmatpush1.msra.mxu0 0.0
    %1238 = vmatprep.subr.mxu0 0.0
    %1239 = vmatpush1.msra.mxu0 0.0
    %1240 = vmatprep.subr.mxu0 0.0
    %1241 = vmatpush1.msra.mxu0 0.0
    %1242 = vmatprep.subr.mxu0 0.0
    %1243 = vmatpush1.msra.mxu0 0.0
    %1244 = vmatprep.subr.mxu0 0.0
    %1245 = vmatpush1.msra.mxu0 0.0
    %1246 = vmatprep.subr.mxu0 0.0
    %1247 = vmatpush1.msra.mxu0 0.0
    %1248 = vmatprep.subr.mxu0 0.0
    %1249 = vmatpush1.msra.mxu0 0.0
    %1250 = vmatprep.subr.mxu0 0.0
    %1251 = vmatpush1.msra.mxu0 0.0
    %1252 = vmatprep.subr.mxu0 0.0
    %1253 = vmatpush1.msra.mxu0 0.0
    %1254 = vmatprep.subr.mxu0 0.0
    %1255 = vmatpush1.msra.mxu0 0.0
    %1256 = vmatprep.subr.mxu0 0.0
    %1257 = vmatpush1.msra.mxu0 0.0
    %1258 = vmatprep.subr.mxu0 0.0
    %1259 = vmatpush1.msra.mxu0 0.0
    %1260 = vmatprep.subr.mxu0 0.0
    %1261 = vmatpush1.msra.mxu0 0.0
    %1262 = vmatprep.subr.mxu0 0.0
    %1263 = vmatpush1.msra.mxu0 0.0
    %1264 = vmatprep.mubr.f32.mxu0 0.0
    %1265 = vmatmul.mubr.f32.gmra.mrb[0].mxu0 %v1012
    %v1266 = vpop.f32.mrb[0].mxu0
    %v1267 = vadd.f32 0.0, %v1266
    %v1268 = vpop.f32.mrb[0].mxu0
    %1269 = vdwg.mxu0
    %1271 = vrot.lane.b32.xlu0 %v403, 96
    %v1272 = vpop.permute.xlu0 %1271
    %1274 = vmatprep.subr.mxu0 0.0
    %1275 = vmatpush1.msra.mxu0 %v1272
    %1276 = vmatprep.subr.mxu0 0.0
    %1277 = vmatpush1.msra.mxu0 0.0
    %1278 = vmatprep.subr.mxu0 0.0
    %1279 = vmatpush1.msra.mxu0 0.0
    %1280 = vmatprep.subr.mxu0 0.0
    %1281 = vmatpush1.msra.mxu0 0.0
    %1282 = vmatprep.subr.mxu0 0.0
    %1283 = vmatpush1.msra.mxu0 0.0
    %1284 = vmatprep.subr.mxu0 0.0
    %1285 = vmatpush1.msra.mxu0 0.0
    %1286 = vmatprep.subr.mxu0 0.0
    %1287 = vmatpush1.msra.mxu0 0.0
    %1288 = vmatprep.subr.mxu0 0.0
    %1289 = vmatpush1.msra.mxu0 0.0
    %1290 = vmatprep.subr.mxu0 0.0
    %1291 = vmatpush1.msra.mxu0 0.0
    %1292 = vmatprep.subr.mxu0 0.0
    %1293 = vmatpush1.msra.mxu0 0.0
    %1294 = vmatprep.subr.mxu0 0.0
    %1295 = vmatpush1.msra.mxu0 0.0
    %1296 = vmatprep.subr.mxu0 0.0
    %1297 = vmatpush1.msra.mxu0 0.0
    %1298 = vmatprep.subr.mxu0 0.0
    %1299 = vmatpush1.msra.mxu0 0.0
    %1300 = vmatprep.subr.mxu0 0.0
    %1301 = vmatpush1.msra.mxu0 0.0
    %1302 = vmatprep.subr.mxu0 0.0
    %1303 = vmatpush1.msra.mxu0 0.0
    %1304 = vmatprep.subr.mxu0 0.0
    %1305 = vmatpush1.msra.mxu0 0.0
    %1306 = vmatprep.subr.mxu0 0.0
    %1307 = vmatpush1.msra.mxu0 0.0
    %1308 = vmatprep.subr.mxu0 0.0
    %1309 = vmatpush1.msra.mxu0 0.0
    %1310 = vmatprep.subr.mxu0 0.0
    %1311 = vmatpush1.msra.mxu0 0.0
    %1312 = vmatprep.subr.mxu0 0.0
    %1313 = vmatpush1.msra.mxu0 0.0
    %1314 = vmatprep.subr.mxu0 0.0
    %1315 = vmatpush1.msra.mxu0 0.0
    %1316 = vmatprep.subr.mxu0 0.0
    %1317 = vmatpush1.msra.mxu0 0.0
    %1318 = vmatprep.subr.mxu0 0.0
    %1319 = vmatpush1.msra.mxu0 0.0
    %1320 = vmatprep.subr.mxu0 0.0
    %1321 = vmatpush1.msra.mxu0 0.0
    %1322 = vmatprep.subr.mxu0 0.0
    %1323 = vmatpush1.msra.mxu0 0.0
    %1324 = vmatprep.subr.mxu0 0.0
    %1325 = vmatpush1.msra.mxu0 0.0
    %1326 = vmatprep.subr.mxu0 0.0
    %1327 = vmatpush1.msra.mxu0 0.0
    %1328 = vmatprep.subr.mxu0 0.0
    %1329 = vmatpush1.msra.mxu0 0.0
    %1330 = vmatprep.subr.mxu0 0.0
    %1331 = vmatpush1.msra.mxu0 0.0
    %1332 = vmatprep.subr.mxu0 0.0
    %1333 = vmatpush1.msra.mxu0 0.0
    %1334 = vmatprep.subr.mxu0 0.0
    %1335 = vmatpush1.msra.mxu0 0.0
    %1336 = vmatprep.subr.mxu0 0.0
    %1337 = vmatpush1.msra.mxu0 0.0
    %1338 = vmatprep.mubr.f32.mxu0 0.0
    %1339 = vmatmul.mubr.f32.gmra.mrb[0].mxu0 %v1124
    %v1340 = vpop.f32.mrb[0].mxu0
    %v1341 = vadd.f32 0.0, %v1340
    %v1342 = vpop.f32.mrb[0].mxu0
    %1343 = vdwg.mxu0
    %1344 = vmatprep.subr.mxu0 0.0
    %1345 = vmatpush1.msra.mxu0 1.0
    %1346 = vmatprep.subr.mxu0 0.0
    %1347 = vmatpush1.msra.mxu0 0.0
    %1348 = vmatprep.subr.mxu0 0.0
    %1349 = vmatpush1.msra.mxu0 0.0
    %1350 = vmatprep.subr.mxu0 0.0
    %1351 = vmatpush1.msra.mxu0 0.0
    %1352 = vmatprep.subr.mxu0 0.0
    %1353 = vmatpush1.msra.mxu0 0.0
    %1354 = vmatprep.subr.mxu0 0.0
    %1355 = vmatpush1.msra.mxu0 0.0
    %1356 = vmatprep.subr.mxu0 0.0
    %1357 = vmatpush1.msra.mxu0 0.0
    %1358 = vmatprep.subr.mxu0 0.0
    %1359 = vmatpush1.msra.mxu0 0.0
    %1360 = vmatprep.subr.mxu0 0.0
    %1361 = vmatpush1.msra.mxu0 0.0
    %1362 = vmatprep.subr.mxu0 0.0
    %1363 = vmatpush1.msra.mxu0 0.0
    %1364 = vmatprep.subr.mxu0 0.0
    %1365 = vmatpush1.msra.mxu0 0.0
    %1366 = vmatprep.subr.mxu0 0.0
    %1367 = vmatpush1.msra.mxu0 0.0
    %1368 = vmatprep.subr.mxu0 0.0
    %1369 = vmatpush1.msra.mxu0 0.0
    %1370 = vmatprep.subr.mxu0 0.0
    %1371 = vmatpush1.msra.mxu0 0.0
    %1372 = vmatprep.subr.mxu0 0.0
    %1373 = vmatpush1.msra.mxu0 0.0
    %1374 = vmatprep.subr.mxu0 0.0
    %1375 = vmatpush1.msra.mxu0 0.0
    %1376 = vmatprep.subr.mxu0 0.0
    %1377 = vmatpush1.msra.mxu0 0.0
    %1378 = vmatprep.subr.mxu0 0.0
    %1379 = vmatpush1.msra.mxu0 0.0
    %1380 = vmatprep.subr.mxu0 0.0
    %1381 = vmatpush1.msra.mxu0 0.0
    %1382 = vmatprep.subr.mxu0 0.0
    %1383 = vmatpush1.msra.mxu0 0.0
    %1384 = vmatprep.subr.mxu0 0.0
    %1385 = vmatpush1.msra.mxu0 0.0
    %1386 = vmatprep.subr.mxu0 0.0
    %1387 = vmatpush1.msra.mxu0 0.0
    %1388 = vmatprep.subr.mxu0 0.0
    %1389 = vmatpush1.msra.mxu0 0.0
    %1390 = vmatprep.subr.mxu0 0.0
    %1391 = vmatpush1.msra.mxu0 0.0
    %1392 = vmatprep.subr.mxu0 0.0
    %1393 = vmatpush1.msra.mxu0 0.0
    %1394 = vmatprep.subr.mxu0 0.0
    %1395 = vmatpush1.msra.mxu0 0.0
    %1396 = vmatprep.subr.mxu0 0.0
    %1397 = vmatpush1.msra.mxu0 0.0
    %1398 = vmatprep.subr.mxu0 0.0
    %1399 = vmatpush1.msra.mxu0 0.0
    %1400 = vmatprep.subr.mxu0 0.0
    %1401 = vmatpush1.msra.mxu0 0.0
    %1402 = vmatprep.subr.mxu0 0.0
    %1403 = vmatpush1.msra.mxu0 0.0
    %1404 = vmatprep.subr.mxu0 0.0
    %1405 = vmatpush1.msra.mxu0 0.0
    %1406 = vmatprep.subr.mxu0 0.0
    %1407 = vmatpush1.msra.mxu0 0.0
    %1408 = vmatprep.mubr.f32.mxu0 0.0
    %1409 = vmatmul.mubr.f32.gmra.mrb[0].mxu0 %v1012
    %v1410 = vpop.f32.mrb[0].mxu0
    %v1411 = vadd.f32 0.0, %v1410
    %v1412 = vpop.f32.mrb[0].mxu0
    %1413 = vdwg.mxu0
    %1414 = vmatprep.subr.mxu0 0.0
    %1415 = vmatpush1.msra.mxu0 1.0
    %1416 = vmatprep.subr.mxu0 0.0
    %1417 = vmatpush1.msra.mxu0 0.0
    %1418 = vmatprep.subr.mxu0 0.0
    %1419 = vmatpush1.msra.mxu0 0.0
    %1420 = vmatprep.subr.mxu0 0.0
    %1421 = vmatpush1.msra.mxu0 0.0
    %1422 = vmatprep.subr.mxu0 0.0
    %1423 = vmatpush1.msra.mxu0 0.0
    %1424 = vmatprep.subr.mxu0 0.0
    %1425 = vmatpush1.msra.mxu0 0.0
    %1426 = vmatprep.subr.mxu0 0.0
    %1427 = vmatpush1.msra.mxu0 0.0
    %1428 = vmatprep.subr.mxu0 0.0
    %1429 = vmatpush1.msra.mxu0 0.0
    %1430 = vmatprep.subr.mxu0 0.0
    %1431 = vmatpush1.msra.mxu0 0.0
    %1432 = vmatprep.subr.mxu0 0.0
    %1433 = vmatpush1.msra.mxu0 0.0
    %1434 = vmatprep.subr.mxu0 0.0
    %1435 = vmatpush1.msra.mxu0 0.0
    %1436 = vmatprep.subr.mxu0 0.0
    %1437 = vmatpush1.msra.mxu0 0.0
    %1438 = vmatprep.subr.mxu0 0.0
    %1439 = vmatpush1.msra.mxu0 0.0
    %1440 = vmatprep.subr.mxu0 0.0
    %1441 = vmatpush1.msra.mxu0 0.0
    %1442 = vmatprep.subr.mxu0 0.0
    %1443 = vmatpush1.msra.mxu0 0.0
    %1444 = vmatprep.subr.mxu0 0.0
    %1445 = vmatpush1.msra.mxu0 0.0
    %1446 = vmatprep.subr.mxu0 0.0
    %1447 = vmatpush1.msra.mxu0 0.0
    %1448 = vmatprep.subr.mxu0 0.0
    %1449 = vmatpush1.msra.mxu0 0.0
    %1450 = vmatprep.subr.mxu0 0.0
    %1451 = vmatpush1.msra.mxu0 0.0
    %1452 = vmatprep.subr.mxu0 0.0
    %1453 = vmatpush1.msra.mxu0 0.0
    %1454 = vmatprep.subr.mxu0 0.0
    %1455 = vmatpush1.msra.mxu0 0.0
    %1456 = vmatprep.subr.mxu0 0.0
    %1457 = vmatpush1.msra.mxu0 0.0
    %1458 = vmatprep.subr.mxu0 0.0
    %1459 = vmatpush1.msra.mxu0 0.0
    %1460 = vmatprep.subr.mxu0 0.0
    %1461 = vmatpush1.msra.mxu0 0.0
    %1462 = vmatprep.subr.mxu0 0.0
    %1463 = vmatpush1.msra.mxu0 0.0
    %1464 = vmatprep.subr.mxu0 0.0
    %1465 = vmatpush1.msra.mxu0 0.0
    %1466 = vmatprep.subr.mxu0 0.0
    %1467 = vmatpush1.msra.mxu0 0.0
    %1468 = vmatprep.subr.mxu0 0.0
    %1469 = vmatpush1.msra.mxu0 0.0
    %1470 = vmatprep.subr.mxu0 0.0
    %1471 = vmatpush1.msra.mxu0 0.0
    %1472 = vmatprep.subr.mxu0 0.0
    %1473 = vmatpush1.msra.mxu0 0.0
    %1474 = vmatprep.subr.mxu0 0.0
    %1475 = vmatpush1.msra.mxu0 0.0
    %1476 = vmatprep.subr.mxu0 0.0
    %1477 = vmatpush1.msra.mxu0 0.0
    %1478 = vmatprep.mubr.f32.mxu0 0.0
    %1479 = vmatmul.mubr.f32.gmra.mrb[0].mxu0 %v1124
    %v1480 = vpop.f32.mrb[0].mxu0
    %v1481 = vadd.f32 0.0, %v1480
    %v1482 = vpop.f32.mrb[0].mxu0
    %1483 = vdwg.mxu0
    %v1484 = vmul.f32 %v1411, %v967
    %v1485 = vmul.f32 %v1481, %v967
    %v1486 = vadd.f32 %v1484, %v1267
    %v1487 = vadd.f32 %v1485, %v1341
    %v1488 = vmul.f32 %v1081, 2.0
    %v1489 = vmul.f32 %v1193, 2.0
    %v1490 = vmul.f32 %v1488, %v965
    %v1491 = vmul.f32 %v1489, %v965
    %v1492 = vsub.f32 %v1486, %v1490
    %v1493 = vsub.f32 %v1487, %v1491
    %v1494 = vmul.f32 %v1492, %v971
    %v1495 = vmul.f32 %v1493, %v971
    %v1496 = vsub.f32 %v1494, %v1411
    %v1497 = vsub.f32 %v1495, %v1481
    %v1498 = vmul.f32 %v1496, %v1496
    %v1499 = vmul.f32 %v1497, %v1497
    %vm1500 = vcmask 125952
    %v1501 = vsel %vm1500, %v1498, 0.0
    %1502 = vadd.xlane.f32.xlu0 %v1501
    %v1503 = vpop.xlane.xlu0 %1502
    %v1504 = vsel %vm1500, %v1499, 0.0
    %1505 = vadd.xlane.f32.xlu0 %v1504
    %v1506 = vpop.xlane.xlu0 %1505
    %vm1507 = vcmask 1043456
    %v1508 = vsel %vm1507, %v1503, 0.0
    %v1509 = vrot.slane %v1508, 4
    %v1510 = vadd.f32 %v1508, %v1509
    %v1511 = vrot.slane %v1510, 2
    %v1512 = vadd.f32 %v1510, %v1511
    %v1513 = vrot.slane %v1512, 1
    %v1514 = vadd.f32 %v1512, %v1513
    %v1515 = vsel %vm1507, %v1506, 0.0
    %v1516 = vrot.slane %v1515, 4
    %v1517 = vadd.f32 %v1515, %v1516
    %v1518 = vrot.slane %v1517, 2
    %v1519 = vadd.f32 %v1517, %v1518
    %v1520 = vrot.slane %v1519, 1
    %v1521 = vadd.f32 %v1519, %v1520
    %v1522 = vmax.f32 %v1514, 1e-24
    %v1523 = vmax.f32 %v1521, 1e-24
    %v1524 = vrsqrt.pop %v1522
    %v1525 = vrsqrt.pop %v1523
    %v1526 = vmul.f32 %v1411, %v965
    %v1527 = vmul.f32 %v1481, %v965
    %v1528 = vsub.f32 %v1081, %v1526
    %v1529 = vsub.f32 %v1193, %v1527
    %v1530 = vmul.f32 %v1528, %v969
    %v1531 = vmul.f32 %v1529, %v969
    %v1532 = vmul.f32 %v1530, %v1530
    %v1533 = vmul.f32 %v1531, %v1531
    %v1534 = vsel %vm1500, %v1532, 0.0
    %1535 = vadd.xlane.f32.xlu0 %v1534
    %v1536 = vpop.xlane.xlu0 %1535
    %v1537 = vsel %vm1500, %v1533, 0.0
    %1538 = vadd.xlane.f32.xlu0 %v1537
    %v1539 = vpop.xlane.xlu0 %1538
    %v1540 = vmax.f32 %v1536, 1e-24
    %v1541 = vmax.f32 %v1539, 1e-24
    %v1542 = vrsqrt.pop %v1540
    %v1543 = vrsqrt.pop %v1541
    %v1544 = vmul.f32 %v1530, %v1542
    %v1545 = vmul.f32 %v1531, %v1543
    %v1546 = vmul.f32 %v1544, %v1544
    %v1547 = vmul.f32 %v1545, %v1545
    %v1548 = vsel %vm1500, %v1546, 0.0
    %1549 = vadd.xlane.f32.xlu0 %v1548
    %v1550 = vpop.xlane.xlu0 %1549
    %v1551 = vsel %vm1500, %v1547, 0.0
    %1552 = vadd.xlane.f32.xlu0 %v1551
    %v1553 = vpop.xlane.xlu0 %1552
    %v1554 = vsel %vm1507, %v1550, 0.0
    %v1555 = vrot.slane %v1554, 4
    %v1556 = vadd.f32 %v1554, %v1555
    %v1557 = vrot.slane %v1556, 2
    %v1558 = vadd.f32 %v1556, %v1557
    %v1559 = vrot.slane %v1558, 1
    %v1560 = vadd.f32 %v1558, %v1559
    %v1561 = vsel %vm1507, %v1553, 0.0
    %v1562 = vrot.slane %v1561, 4
    %v1563 = vadd.f32 %v1561, %v1562
    %v1564 = vrot.slane %v1563, 2
    %v1565 = vadd.f32 %v1563, %v1564
    %v1566 = vrot.slane %v1565, 1
    %v1567 = vadd.f32 %v1565, %v1566
    %v1568 = vmax.f32 %v1560, 1e-24
    %v1569 = vmax.f32 %v1567, 1e-24
    %v1570 = vrsqrt.pop %v1568
    %v1571 = vrsqrt.pop %v1569
    %v1572 = vmul.f32 %v1544, %v1570
    %v1574 = vunpack.c.l.s4 1983009808
    %v1575 = vunpack.c.0.s8 %v1574
    %v1576 = vlaneseq
    %v1577 = vshrl.u32 %v1576, 7
    %v1578 = vsub.s32 %v1575, %v1577
    %v1579 = vrot.slane %v1572, %v1578
    %v1580 = vmul.f32 %v1545, %v1571
    %v1582 = vunpack.c.l.s4 1983009808
    %v1583 = vunpack.c.0.s8 %v1582
    %v1584 = vlaneseq
    %v1585 = vshrl.u32 %v1584, 7
    %v1586 = vsub.s32 %v1583, %v1585
    %v1587 = vrot.slane %v1580, %v1586
    %v1588 = vcombine.low %v1579, %v1587
    %v1589 = vcombine.high %v1579, %v1587
    %v1591 = vunpack.c.l.s4 1934713408
    %v1592 = vunpack.c.0.s8 %v1591
    %v1593 = vlaneseq
    %v1594 = vshrl.u32 %v1593, 7
    %v1595 = vsub.s32 %v1592, %v1594
    %v1596 = vrot.slane %v1588, %v1595
    %v1598 = vunpack.c.l.s4 1934713408
    %v1599 = vunpack.c.0.s8 %v1598
    %v1600 = vlaneseq
    %v1601 = vshrl.u32 %v1600, 7
    %v1602 = vsub.s32 %v1599, %v1601
    %v1603 = vrot.slane %v1589, %v1602
    %v1604 = vcombine.high %v1596, 0.0
    %v1605 = vcombine.high %v1603, 0.0
    %1607 = vrot.lane.b32.xlu0 %v1604, 16
    %v1608 = vpop.permute.xlu0 %1607
    %1611 = vrot.lane.b32.xlu0 %v1603, 32
    %v1612 = vpop.permute.xlu0 %1611
    %1615 = vrot.lane.b32.xlu0 %v1605, 48
    %v1616 = vpop.permute.xlu0 %1615
    %vm1618 = vcmask 130048
    %v1619 = vsel %vm1618, %v1596, %v1608
    %v1620 = vsel %vm700, %v1619, %v1612
    %v1621 = vsel %vm48, %v1620, %v1616
    %v1622 = vmul.f32 %v1496, %v1524
    %v1624 = vunpack.c.l.s4 1983009808
    %v1625 = vunpack.c.0.s8 %v1624
    %v1626 = vlaneseq
    %v1627 = vshrl.u32 %v1626, 7
    %v1628 = vsub.s32 %v1625, %v1627
    %v1629 = vrot.slane %v1622, %v1628
    %v1630 = vmul.f32 %v1497, %v1525
    %v1632 = vunpack.c.l.s4 1983009808
    %v1633 = vunpack.c.0.s8 %v1632
    %v1634 = vlaneseq
    %v1635 = vshrl.u32 %v1634, 7
    %v1636 = vsub.s32 %v1633, %v1635
    %v1637 = vrot.slane %v1630, %v1636
    %v1638 = vcombine.low %v1629, %v1637
    %v1639 = vcombine.high %v1629, %v1637
    %v1641 = vunpack.c.l.s4 1934713408
    %v1642 = vunpack.c.0.s8 %v1641
    %v1643 = vlaneseq
    %v1644 = vshrl.u32 %v1643, 7
    %v1645 = vsub.s32 %v1642, %v1644
    %v1646 = vrot.slane %v1638, %v1645
    %v1648 = vunpack.c.l.s4 1934713408
    %v1649 = vunpack.c.0.s8 %v1648
    %v1650 = vlaneseq
    %v1651 = vshrl.u32 %v1650, 7
    %v1652 = vsub.s32 %v1649, %v1651
    %v1653 = vrot.slane %v1639, %v1652
    %v1654 = vcombine.high %v1646, 0.0
    %v1655 = vcombine.high %v1653, 0.0
    %1657 = vrot.lane.b32.xlu0 %v1654, 16
    %v1658 = vpop.permute.xlu0 %1657
    %1661 = vrot.lane.b32.xlu0 %v1653, 32
    %v1662 = vpop.permute.xlu0 %1661
    %1665 = vrot.lane.b32.xlu0 %v1655, 48
    %v1666 = vpop.permute.xlu0 %1665
    %v1668 = vsel %vm1618, %v1646, %v1658
    %v1669 = vsel %vm700, %v1668, %v1662
    %v1670 = vsel %vm48, %v1669, %v1666
    %v1671 = vld [vmem:[%s5] sm:$0xff]
    %v1672 = vld [vmem:[%s5 + $0x8] sm:$0xff]
    %v1673 = vld [vmem:[%s5 + $0x10] sm:$0xff]
    %v1674 = vld [vmem:[%s5 + $0x18] sm:$0xff]
    %v1675 = vld [vmem:[%s5 + $0x20] sm:$0xff]
    %v1676 = vld [vmem:[%s5 + $0x28] sm:$0xff]
    %v1677 = vld [vmem:[%s5 + $0x30] sm:$0xff]
    %v1678 = vld [vmem:[%s5 + $0x38] sm:$0xff]
    %v1679 = vld [vmem:[%s5 + $0x40] sm:$0xff]
    %v1680 = vld [vmem:[%s5 + $0x48] sm:$0xff]
    %v1681 = vld [vmem:[%s5 + $0x50] sm:$0xff]
    %v1682 = vld [vmem:[%s5 + $0x58] sm:$0xff]
    %v1683 = vld [vmem:[%s5 + $0x60] sm:$0xff]
    %v1684 = vld [vmem:[%s5 + $0x68] sm:$0xff]
    %v1685 = vld [vmem:[%s5 + $0x70] sm:$0xff]
    %v1686 = vld [vmem:[%s5 + $0x78] sm:$0xff]
    %v1687 = vld [vmem:[%s5 + $0x80] sm:$0xff]
    %v1688 = vld [vmem:[%s5 + $0x88] sm:$0xff]
    %v1689 = vld [vmem:[%s5 + $0x90] sm:$0xff]
    %v1690 = vld [vmem:[%s5 + $0x98] sm:$0xff]
    %v1691 = vld [vmem:[%s5 + $0xa0] sm:$0xff]
    %v1692 = vld [vmem:[%s5 + $0xa8] sm:$0xff]
    %v1693 = vld [vmem:[%s5 + $0xb0] sm:$0xff]
    %v1694 = vld [vmem:[%s5 + $0xb8] sm:$0xff]
    %v1695 = vld [vmem:[%s5 + $0xc0] sm:$0xff]
    %v1696 = vld [vmem:[%s5 + $0xc8] sm:$0xff]
    %v1697 = vld [vmem:[%s5 + $0xd0] sm:$0xff]
    %v1698 = vld [vmem:[%s5 + $0xd8] sm:$0xff]
    %v1699 = vld [vmem:[%s5 + $0xe0] sm:$0xff]
    %v1700 = vld [vmem:[%s5 + $0xe8] sm:$0xff]
    %v1701 = vld [vmem:[%s5 + $0xf0] sm:$0xff]
    %v1702 = vld [vmem:[%s5 + $0xf8] sm:$0xff]
    %s1703 = scalar_lea.vmem %s5, 256
    %v1704 = vld [vmem:[%s1703] sm:$0xff]
    %v1705 = vld [vmem:[%s1703 + $0x8] sm:$0xff]
    %v1706 = vld [vmem:[%s1703 + $0x10] sm:$0xff]
    %v1707 = vld [vmem:[%s1703 + $0x18] sm:$0xff]
    %v1708 = vld [vmem:[%s1703 + $0x20] sm:$0xff]
    %v1709 = vld [vmem:[%s1703 + $0x28] sm:$0xff]
    %v1710 = vld [vmem:[%s1703 + $0x30] sm:$0xff]
    %v1711 = vld [vmem:[%s1703 + $0x38] sm:$0xff]
    %v1712 = vld [vmem:[%s1703 + $0x40] sm:$0xff]
    %v1713 = vld [vmem:[%s1703 + $0x48] sm:$0xff]
    %v1714 = vld [vmem:[%s1703 + $0x50] sm:$0xff]
    %v1715 = vld [vmem:[%s1703 + $0x58] sm:$0xff]
    %v1716 = vld [vmem:[%s1703 + $0x60] sm:$0xff]
    %v1717 = vld [vmem:[%s1703 + $0x68] sm:$0xff]
    %v1718 = vld [vmem:[%s1703 + $0x70] sm:$0xff]
    %v1719 = vld [vmem:[%s1703 + $0x78] sm:$0xff]
    %v1720 = vld [vmem:[%s1703 + $0x80] sm:$0xff]
    %v1721 = vld [vmem:[%s1703 + $0x88] sm:$0xff]
    %v1722 = vld [vmem:[%s1703 + $0x90] sm:$0xff]
    %v1723 = vld [vmem:[%s1703 + $0x98] sm:$0xff]
    %v1724 = vld [vmem:[%s1703 + $0xa0] sm:$0xff]
    %v1725 = vld [vmem:[%s1703 + $0xa8] sm:$0xff]
    %v1726 = vld [vmem:[%s1703 + $0xb0] sm:$0xff]
    %v1727 = vld [vmem:[%s1703 + $0xb8] sm:$0xff]
    %v1728 = vld [vmem:[%s1703 + $0xc0] sm:$0xff]
    %v1729 = vld [vmem:[%s1703 + $0xc8] sm:$0xff]
    %v1730 = vld [vmem:[%s1703 + $0xd0] sm:$0xff]
    %v1731 = vld [vmem:[%s1703 + $0xd8] sm:$0xff]
    %v1732 = vld [vmem:[%s1703 + $0xe0] sm:$0xff]
    %v1733 = vld [vmem:[%s1703 + $0xe8] sm:$0xff]
    %v1734 = vld [vmem:[%s1703 + $0xf0] sm:$0xff]
    %v1735 = vld [vmem:[%s1703 + $0xf8] sm:$0xff]
    %1736 = vmatprep.subr.mxu0 0.0
    %1737 = vmatpush1.msra.mxu0 %v1704
    %1738 = vmatprep.subr.mxu0 0.0
    %1739 = vmatpush1.msra.mxu0 %v1705
    %1740 = vmatprep.subr.mxu0 0.0
    %1741 = vmatpush1.msra.mxu0 %v1706
    %1742 = vmatprep.subr.mxu0 0.0
    %1743 = vmatpush1.msra.mxu0 %v1707
    %1744 = vmatprep.subr.mxu0 0.0
    %1745 = vmatpush1.msra.mxu0 %v1708
    %1746 = vmatprep.subr.mxu0 0.0
    %1747 = vmatpush1.msra.mxu0 %v1709
    %1748 = vmatprep.subr.mxu0 0.0
    %1749 = vmatpush1.msra.mxu0 %v1710
    %1750 = vmatprep.subr.mxu0 0.0
    %1751 = vmatpush1.msra.mxu0 %v1711
    %1752 = vmatprep.subr.mxu0 0.0
    %1753 = vmatpush1.msra.mxu0 %v1712
    %1754 = vmatprep.subr.mxu0 0.0
    %1755 = vmatpush1.msra.mxu0 %v1713
    %1756 = vmatprep.subr.mxu0 0.0
    %1757 = vmatpush1.msra.mxu0 %v1714
    %1758 = vmatprep.subr.mxu0 0.0
    %1759 = vmatpush1.msra.mxu0 %v1715
    %1760 = vmatprep.subr.mxu0 0.0
    %1761 = vmatpush1.msra.mxu0 %v1716
    %1762 = vmatprep.subr.mxu0 0.0
    %1763 = vmatpush1.msra.mxu0 %v1717
    %1764 = vmatprep.subr.mxu0 0.0
    %1765 = vmatpush1.msra.mxu0 %v1718
    %1766 = vmatprep.subr.mxu0 0.0
    %1767 = vmatpush1.msra.mxu0 %v1719
    %1768 = vmatprep.subr.mxu0 0.0
    %1769 = vmatpush1.msra.mxu0 %v1720
    %1770 = vmatprep.subr.mxu0 0.0
    %1771 = vmatpush1.msra.mxu0 %v1721
    %1772 = vmatprep.subr.mxu0 0.0
    %1773 = vmatpush1.msra.mxu0 %v1722
    %1774 = vmatprep.subr.mxu0 0.0
    %1775 = vmatpush1.msra.mxu0 %v1723
    %1776 = vmatprep.subr.mxu0 0.0
    %1777 = vmatpush1.msra.mxu0 %v1724
    %1778 = vmatprep.subr.mxu0 0.0
    %1779 = vmatpush1.msra.mxu0 %v1725
    %1780 = vmatprep.subr.mxu0 0.0
    %1781 = vmatpush1.msra.mxu0 %v1726
    %1782 = vmatprep.subr.mxu0 0.0
    %1783 = vmatpush1.msra.mxu0 %v1727
    %1784 = vmatprep.subr.mxu0 0.0
    %1785 = vmatpush1.msra.mxu0 %v1728
    %1786 = vmatprep.subr.mxu0 0.0
    %1787 = vmatpush1.msra.mxu0 %v1729
    %1788 = vmatprep.subr.mxu0 0.0
    %1789 = vmatpush1.msra.mxu0 %v1730
    %1790 = vmatprep.subr.mxu0 0.0
    %1791 = vmatpush1.msra.mxu0 %v1731
    %1792 = vmatprep.subr.mxu0 0.0
    %1793 = vmatpush1.msra.mxu0 %v1732
    %1794 = vmatprep.subr.mxu0 0.0
    %1795 = vmatpush1.msra.mxu0 %v1733
    %1796 = vmatprep.subr.mxu0 0.0
    %1797 = vmatpush1.msra.mxu0 %v1734
    %1798 = vmatprep.subr.mxu0 0.0
    %1799 = vmatpush1.msra.mxu0 %v1735
    %1800 = vmatprep.mubr.f32.mxu0 %v964
    %1801 = vmatmul.mubr.f32.gmra.mrb[0].mxu0 %v961
    %v1802 = vpop.f32.mrb[0].mxu0
    %v1803 = vadd.f32 0.0, %v1802
    %v1804 = vpop.f32.mrb[0].mxu0
    %1805 = vdwg.mxu0
    %1806 = vmatprep.subr.mxu0 0.0
    %1807 = vmatpush1.msra.mxu0 %v1671
    %1808 = vmatprep.subr.mxu0 0.0
    %1809 = vmatpush1.msra.mxu0 %v1672
    %1810 = vmatprep.subr.mxu0 0.0
    %1811 = vmatpush1.msra.mxu0 %v1673
    %1812 = vmatprep.subr.mxu0 0.0
    %1813 = vmatpush1.msra.mxu0 %v1674
    %1814 = vmatprep.subr.mxu0 0.0
    %1815 = vmatpush1.msra.mxu0 %v1675
    %1816 = vmatprep.subr.mxu0 0.0
    %1817 = vmatpush1.msra.mxu0 %v1676
    %1818 = vmatprep.subr.mxu0 0.0
    %1819 = vmatpush1.msra.mxu0 %v1677
    %1820 = vmatprep.subr.mxu0 0.0
    %1821 = vmatpush1.msra.mxu0 %v1678
    %1822 = vmatprep.subr.mxu0 0.0
    %1823 = vmatpush1.msra.mxu0 %v1679
    %1824 = vmatprep.subr.mxu0 0.0
    %1825 = vmatpush1.msra.mxu0 %v1680
    %1826 = vmatprep.subr.mxu0 0.0
    %1827 = vmatpush1.msra.mxu0 %v1681
    %1828 = vmatprep.subr.mxu0 0.0
    %1829 = vmatpush1.msra.mxu0 %v1682
    %1830 = vmatprep.subr.mxu0 0.0
    %1831 = vmatpush1.msra.mxu0 %v1683
    %1832 = vmatprep.subr.mxu0 0.0
    %1833 = vmatpush1.msra.mxu0 %v1684
    %1834 = vmatprep.subr.mxu0 0.0
    %1835 = vmatpush1.msra.mxu0 %v1685
    %1836 = vmatprep.subr.mxu0 0.0
    %1837 = vmatpush1.msra.mxu0 %v1686
    %1838 = vmatprep.subr.mxu0 0.0
    %1839 = vmatpush1.msra.mxu0 %v1687
    %1840 = vmatprep.subr.mxu0 0.0
    %1841 = vmatpush1.msra.mxu0 %v1688
    %1842 = vmatprep.subr.mxu0 0.0
    %1843 = vmatpush1.msra.mxu0 %v1689
    %1844 = vmatprep.subr.mxu0 0.0
    %1845 = vmatpush1.msra.mxu0 %v1690
    %1846 = vmatprep.subr.mxu0 0.0
    %1847 = vmatpush1.msra.mxu0 %v1691
    %1848 = vmatprep.subr.mxu0 0.0
    %1849 = vmatpush1.msra.mxu0 %v1692
    %1850 = vmatprep.subr.mxu0 0.0
    %1851 = vmatpush1.msra.mxu0 %v1693
    %1852 = vmatprep.subr.mxu0 0.0
    %1853 = vmatpush1.msra.mxu0 %v1694
    %1854 = vmatprep.subr.mxu0 0.0
    %1855 = vmatpush1.msra.mxu0 %v1695
    %1856 = vmatprep.subr.mxu0 0.0
    %1857 = vmatpush1.msra.mxu0 %v1696
    %1858 = vmatprep.subr.mxu0 0.0
    %1859 = vmatpush1.msra.mxu0 %v1697
    %1860 = vmatprep.subr.mxu0 0.0
    %1861 = vmatpush1.msra.mxu0 %v1698
    %1862 = vmatprep.subr.mxu0 0.0
    %1863 = vmatpush1.msra.mxu0 %v1699
    %1864 = vmatprep.subr.mxu0 0.0
    %1865 = vmatpush1.msra.mxu0 %v1700
    %1866 = vmatprep.subr.mxu0 0.0
    %1867 = vmatpush1.msra.mxu0 %v1701
    %1868 = vmatprep.subr.mxu0 0.0
    %1869 = vmatpush1.msra.mxu0 %v1702
    %1870 = vmatprep.mubr.f32.mxu0 %v868
    %1871 = vmatmul.mubr.f32.gmra.mrb[0].mxu0 %v865
    %v1872 = vpop.f32.mrb[0].mxu0
    %v1873 = vadd.f32 %v1803, %v1872
    %v1874 = vpop.f32.mrb[0].mxu0
    %1875 = vdwg.mxu0
    %v1876 = vld [vmem:[%s6] sm:$0xff]
    %v1877 = vld [vmem:[%s6 + $0x8] sm:$0xff]
    %v1878 = vld [vmem:[%s6 + $0x10] sm:$0xff]
    %v1879 = vld [vmem:[%s6 + $0x18] sm:$0xff]
    %v1880 = vld [vmem:[%s6 + $0x20] sm:$0xff]
    %v1881 = vld [vmem:[%s6 + $0x28] sm:$0xff]
    %v1882 = vld [vmem:[%s6 + $0x30] sm:$0xff]
    %v1883 = vld [vmem:[%s6 + $0x38] sm:$0xff]
    %v1885 = vsel %vm862, %v1621, 0
    %1887 = vmatprep.subr.mxu0 0.0
    %1888 = vmatpush1.msra.mxu0 %v1876
    %1889 = vmatprep.subr.mxu0 0.0
    %1890 = vmatpush1.msra.mxu0 %v1877
    %1891 = vmatprep.subr.mxu0 0.0
    %1892 = vmatpush1.msra.mxu0 %v1878
    %1893 = vmatprep.subr.mxu0 0.0
    %1894 = vmatpush1.msra.mxu0 %v1879
    %1895 = vmatprep.subr.mxu0 0.0
    %1896 = vmatpush1.msra.mxu0 %v1880
    %1897 = vmatprep.subr.mxu0 0.0
    %1898 = vmatpush1.msra.mxu0 %v1881
    %1899 = vmatprep.subr.mxu0 0.0
    %1900 = vmatpush1.msra.mxu0 %v1882
    %1901 = vmatprep.subr.mxu0 0.0
    %1902 = vmatpush1.msra.mxu0 %v1883
    %1903 = vmatprep.subr.mxu0 0.0
    %1904 = vmatpush1.msra.mxu0 0.0
    %1905 = vmatprep.subr.mxu0 0.0
    %1906 = vmatpush1.msra.mxu0 0.0
    %1907 = vmatprep.subr.mxu0 0.0
    %1908 = vmatpush1.msra.mxu0 0.0
    %1909 = vmatprep.subr.mxu0 0.0
    %1910 = vmatpush1.msra.mxu0 0.0
    %1911 = vmatprep.subr.mxu0 0.0
    %1912 = vmatpush1.msra.mxu0 0.0
    %1913 = vmatprep.subr.mxu0 0.0
    %1914 = vmatpush1.msra.mxu0 0.0
    %1915 = vmatprep.subr.mxu0 0.0
    %1916 = vmatpush1.msra.mxu0 0.0
    %1917 = vmatprep.subr.mxu0 0.0
    %1918 = vmatpush1.msra.mxu0 0.0
    %1919 = vmatprep.subr.mxu0 0.0
    %1920 = vmatpush1.msra.mxu0 0.0
    %1921 = vmatprep.subr.mxu0 0.0
    %1922 = vmatpush1.msra.mxu0 0.0
    %1923 = vmatprep.subr.mxu0 0.0
    %1924 = vmatpush1.msra.mxu0 0.0
    %1925 = vmatprep.subr.mxu0 0.0
    %1926 = vmatpush1.msra.mxu0 0.0
    %1927 = vmatprep.subr.mxu0 0.0
    %1928 = vmatpush1.msra.mxu0 0.0
    %1929 = vmatprep.subr.mxu0 0.0
    %1930 = vmatpush1.msra.mxu0 0.0
    %1931 = vmatprep.subr.mxu0 0.0
    %1932 = vmatpush1.msra.mxu0 0.0
    %1933 = vmatprep.subr.mxu0 0.0
    %1934 = vmatpush1.msra.mxu0 0.0
    %1935 = vmatprep.subr.mxu0 0.0
    %1936 = vmatpush1.msra.mxu0 0.0
    %1937 = vmatprep.subr.mxu0 0.0
    %1938 = vmatpush1.msra.mxu0 0.0
    %1939 = vmatprep.subr.mxu0 0.0
    %1940 = vmatpush1.msra.mxu0 0.0
    %1941 = vmatprep.subr.mxu0 0.0
    %1942 = vmatpush1.msra.mxu0 0.0
    %1943 = vmatprep.subr.mxu0 0.0
    %1944 = vmatpush1.msra.mxu0 0.0
    %1945 = vmatprep.subr.mxu0 0.0
    %1946 = vmatpush1.msra.mxu0 0.0
    %1947 = vmatprep.subr.mxu0 0.0
    %1948 = vmatpush1.msra.mxu0 0.0
    %1949 = vmatprep.subr.mxu0 0.0
    %1950 = vmatpush1.msra.mxu0 0.0
    %1951 = vmatprep.mubr.f32.mxu0 0.0
    %1952 = vmatmul.mubr.f32.gmra.mrb[0].mxu0 %v1885
    %v1953 = vpop.f32.mrb[0].mxu0
    %v1954 = vadd.f32 0.0, %v1953
    %v1955 = vpop.f32.mrb[0].mxu0
    %1956 = vdwg.mxu0
    %v1957 = vadd.f32 %v1873, %v1954
    %s1958 = scalar_lea.vmem %s6, 64
    %v1959 = vld [vmem:[%s1958] sm:$0xff]
    %v1960 = vld [vmem:[%s1958 + $0x8] sm:$0xff]
    %v1961 = vld [vmem:[%s1958 + $0x10] sm:$0xff]
    %v1962 = vld [vmem:[%s1958 + $0x18] sm:$0xff]
    %v1963 = vld [vmem:[%s1958 + $0x20] sm:$0xff]
    %v1964 = vld [vmem:[%s1958 + $0x28] sm:$0xff]
    %v1965 = vld [vmem:[%s1958 + $0x30] sm:$0xff]
    %v1966 = vld [vmem:[%s1958 + $0x38] sm:$0xff]
    %v1968 = vsel %vm862, %v1670, 0
    %1970 = vmatprep.subr.mxu0 0.0
    %1971 = vmatpush1.msra.mxu0 %v1959
    %1972 = vmatprep.subr.mxu0 0.0
    %1973 = vmatpush1.msra.mxu0 %v1960
    %1974 = vmatprep.subr.mxu0 0.0
    %1975 = vmatpush1.msra.mxu0 %v1961
    %1976 = vmatprep.subr.mxu0 0.0
    %1977 = vmatpush1.msra.mxu0 %v1962
    %1978 = vmatprep.subr.mxu0 0.0
    %1979 = vmatpush1.msra.mxu0 %v1963
    %1980 = vmatprep.subr.mxu0 0.0
    %1981 = vmatpush1.msra.mxu0 %v1964
    %1982 = vmatprep.subr.mxu0 0.0
    %1983 = vmatpush1.msra.mxu0 %v1965
    %1984 = vmatprep.subr.mxu0 0.0
    %1985 = vmatpush1.msra.mxu0 %v1966
    %1986 = vmatprep.subr.mxu0 0.0
    %1987 = vmatpush1.msra.mxu0 0.0
    %1988 = vmatprep.subr.mxu0 0.0
    %1989 = vmatpush1.msra.mxu0 0.0
    %1990 = vmatprep.subr.mxu0 0.0
    %1991 = vmatpush1.msra.mxu0 0.0
    %1992 = vmatprep.subr.mxu0 0.0
    %1993 = vmatpush1.msra.mxu0 0.0
    %1994 = vmatprep.subr.mxu0 0.0
    %1995 = vmatpush1.msra.mxu0 0.0
    %1996 = vmatprep.subr.mxu0 0.0
    %1997 = vmatpush1.msra.mxu0 0.0
    %1998 = vmatprep.subr.mxu0 0.0
    %1999 = vmatpush1.msra.mxu0 0.0
    %2000 = vmatprep.subr.mxu0 0.0
    %2001 = vmatpush1.msra.mxu0 0.0
    %2002 = vmatprep.subr.mxu0 0.0
    %2003 = vmatpush1.msra.mxu0 0.0
    %2004 = vmatprep.subr.mxu0 0.0
    %2005 = vmatpush1.msra.mxu0 0.0
    %2006 = vmatprep.subr.mxu0 0.0
    %2007 = vmatpush1.msra.mxu0 0.0
    %2008 = vmatprep.subr.mxu0 0.0
    %2009 = vmatpush1.msra.mxu0 0.0
    %2010 = vmatprep.subr.mxu0 0.0
    %2011 = vmatpush1.msra.mxu0 0.0
    %2012 = vmatprep.subr.mxu0 0.0
    %2013 = vmatpush1.msra.mxu0 0.0
    %2014 = vmatprep.subr.mxu0 0.0
    %2015 = vmatpush1.msra.mxu0 0.0
    %2016 = vmatprep.subr.mxu0 0.0
    %2017 = vmatpush1.msra.mxu0 0.0
    %2018 = vmatprep.subr.mxu0 0.0
    %2019 = vmatpush1.msra.mxu0 0.0
    %2020 = vmatprep.subr.mxu0 0.0
    %2021 = vmatpush1.msra.mxu0 0.0
    %2022 = vmatprep.subr.mxu0 0.0
    %2023 = vmatpush1.msra.mxu0 0.0
    %2024 = vmatprep.subr.mxu0 0.0
    %2025 = vmatpush1.msra.mxu0 0.0
    %2026 = vmatprep.subr.mxu0 0.0
    %2027 = vmatpush1.msra.mxu0 0.0
    %2028 = vmatprep.subr.mxu0 0.0
    %2029 = vmatpush1.msra.mxu0 0.0
    %2030 = vmatprep.subr.mxu0 0.0
    %2031 = vmatpush1.msra.mxu0 0.0
    %2032 = vmatprep.subr.mxu0 0.0
    %2033 = vmatpush1.msra.mxu0 0.0
    %2034 = vmatprep.mubr.f32.mxu0 0.0
    %2035 = vmatmul.mubr.f32.gmra.mrb[0].mxu0 %v1968
    %v2036 = vpop.f32.mrb[0].mxu0
    %v2037 = vadd.f32 0.0, %v2036
    %v2038 = vpop.f32.mrb[0].mxu0
    %2039 = vdwg.mxu0
    %v2040 = vadd.f32 %v1957, %v2037
    %v2041 = vld [vmem:[%s1 + $0x3] ss:$0 sm:$0xff]
    %v2042 = vadd.f32 %v2040, %v2041
    %v2043 = vmax.f32 %v2042, 0.0
    %v2044 = vmin.f32 %v2043, 6.0
    %v2045 = vld [vmem:[%s7] sm:$0xff]
    %v2046 = vld [vmem:[%s7 + $0x8] sm:$0xff]
    %v2047 = vld [vmem:[%s7 + $0x10] sm:$0xff]
    %v2048 = vld [vmem:[%s7 + $0x18] sm:$0xff]
    %v2049 = vld [vmem:[%s1 + $0x4] ss:$0 sm:$0xff]
    %v2051 = vsel %vm700, %v2044, 0
    %2053 = vmatprep.subr.mxu0 0.0
    %2054 = vmatpush1.msra.mxu0 %v2045
    %2055 = vmatprep.subr.mxu0 0.0
    %2056 = vmatpush1.msra.mxu0 %v2046
    %2057 = vmatprep.subr.mxu0 0.0
    %2058 = vmatpush1.msra.mxu0 %v2047
    %2059 = vmatprep.subr.mxu0 0.0
    %2060 = vmatpush1.msra.mxu0 %v2048
    %2061 = vmatprep.subr.mxu0 0.0
    %2062 = vmatpush1.msra.mxu0 0.0
    %2063 = vmatprep.subr.mxu0 0.0
    %2064 = vmatpush1.msra.mxu0 0.0
    %2065 = vmatprep.subr.mxu0 0.0
    %2066 = vmatpush1.msra.mxu0 0.0
    %2067 = vmatprep.subr.mxu0 0.0
    %2068 = vmatpush1.msra.mxu0 0.0
    %2069 = vmatprep.subr.mxu0 0.0
    %2070 = vmatpush1.msra.mxu0 0.0
    %2071 = vmatprep.subr.mxu0 0.0
    %2072 = vmatpush1.msra.mxu0 0.0
    %2073 = vmatprep.subr.mxu0 0.0
    %2074 = vmatpush1.msra.mxu0 0.0
    %2075 = vmatprep.subr.mxu0 0.0
    %2076 = vmatpush1.msra.mxu0 0.0
    %2077 = vmatprep.subr.mxu0 0.0
    %2078 = vmatpush1.msra.mxu0 0.0
    %2079 = vmatprep.subr.mxu0 0.0
    %2080 = vmatpush1.msra.mxu0 0.0
    %2081 = vmatprep.subr.mxu0 0.0
    %2082 = vmatpush1.msra.mxu0 0.0
    %2083 = vmatprep.subr.mxu0 0.0
    %2084 = vmatpush1.msra.mxu0 0.0
    %2085 = vmatprep.subr.mxu0 0.0
    %2086 = vmatpush1.msra.mxu0 0.0
    %2087 = vmatprep.subr.mxu0 0.0
    %2088 = vmatpush1.msra.mxu0 0.0
    %2089 = vmatprep.subr.mxu0 0.0
    %2090 = vmatpush1.msra.mxu0 0.0
    %2091 = vmatprep.subr.mxu0 0.0
    %2092 = vmatpush1.msra.mxu0 0.0
    %2093 = vmatprep.subr.mxu0 0.0
    %2094 = vmatpush1.msra.mxu0 0.0
    %2095 = vmatprep.subr.mxu0 0.0
    %2096 = vmatpush1.msra.mxu0 0.0
    %2097 = vmatprep.subr.mxu0 0.0
    %2098 = vmatpush1.msra.mxu0 0.0
    %2099 = vmatprep.subr.mxu0 0.0
    %2100 = vmatpush1.msra.mxu0 0.0
    %2101 = vmatprep.subr.mxu0 0.0
    %2102 = vmatpush1.msra.mxu0 0.0
    %2103 = vmatprep.subr.mxu0 0.0
    %2104 = vmatpush1.msra.mxu0 0.0
    %2105 = vmatprep.subr.mxu0 0.0
    %2106 = vmatpush1.msra.mxu0 0.0
    %2107 = vmatprep.subr.mxu0 0.0
    %2108 = vmatpush1.msra.mxu0 0.0
    %2109 = vmatprep.subr.mxu0 0.0
    %2110 = vmatpush1.msra.mxu0 0.0
    %2111 = vmatprep.subr.mxu0 0.0
    %2112 = vmatpush1.msra.mxu0 0.0
    %2113 = vmatprep.subr.mxu0 0.0
    %2114 = vmatpush1.msra.mxu0 0.0
    %2115 = vmatprep.subr.mxu0 0.0
    %2116 = vmatpush1.msra.mxu0 0.0
    %2117 = vmatprep.mubr.f32.mxu0 0.0
    %2118 = vmatmul.mubr.f32.gmra.mrb[0].mxu0 %v2051
    %v2119 = vpop.f32.mrb[0].mxu0
    %v2120 = vadd.f32 %v2049, %v2119
    %v2121 = vpop.f32.mrb[0].mxu0
    %2122 = vdwg.mxu0
    %v2123 = vmul.f32 %v2120, 0.5
    %v2124 = vtanh.pop %v2123
    %v2125 = vmul.f32 %v2124, 0.5
    %v2126 = vadd.f32 %v2125, 0.5
    %v2127 = vmul.f32 %v2044, %v2126
    %v2128 = vld [vmem:[%s8] sm:$0xff]
    %v2129 = vld [vmem:[%s8 + $0x8] sm:$0xff]
    %v2130 = vld [vmem:[%s8 + $0x10] sm:$0xff]
    %v2131 = vld [vmem:[%s8 + $0x18] sm:$0xff]
    %v2132 = vld [vmem:[%s8 + $0x20] sm:$0xff]
    %v2133 = vld [vmem:[%s8 + $0x28] sm:$0xff]
    %v2134 = vld [vmem:[%s8 + $0x30] sm:$0xff]
    %v2135 = vld [vmem:[%s8 + $0x38] sm:$0xff]
    %v2136 = vld [vmem:[%s8 + $0x40] sm:$0xff]
    %v2137 = vld [vmem:[%s8 + $0x48] sm:$0xff]
    %v2138 = vld [vmem:[%s8 + $0x50] sm:$0xff]
    %v2139 = vld [vmem:[%s8 + $0x58] sm:$0xff]
    %v2140 = vld [vmem:[%s8 + $0x60] sm:$0xff]
    %v2141 = vld [vmem:[%s8 + $0x68] sm:$0xff]
    %v2142 = vld [vmem:[%s8 + $0x70] sm:$0xff]
    %v2143 = vld [vmem:[%s8 + $0x78] sm:$0xff]
    %v2144 = vld [vmem:[%s8 + $0x80] sm:$0xff]
    %v2145 = vld [vmem:[%s8 + $0x88] sm:$0xff]
    %v2146 = vld [vmem:[%s8 + $0x90] sm:$0xff]
    %v2147 = vld [vmem:[%s8 + $0x98] sm:$0xff]
    %s2148 = scalar_lea.vmem %s1, 5
    %v2149 = vld [vmem:[%s2148] ss:$8 sm:$0xf]
    %v2150 = vld [vmem:[%s2148] ss:$8 sm:$0x10]
    %v2151 = vor.u32 %v2149, %v2150
    %v2153 = vlaneseq
    %v2154 = vshrl.u32 %v2153, 7
    %v2155 = vsub.s32 0, %v2154
    %v2156 = vrot.slane %v2151, %v2155
    %v2157 = vlaneseq
    %v2158 = vshrl.u32 %v2157, 7
    %v2159 = vsub.s32 1, %v2158
    %v2160 = vrot.slane %v2151, %v2159
    %v2161 = vlaneseq
    %v2162 = vshrl.u32 %v2161, 7
    %v2163 = vsub.s32 2, %v2162
    %v2164 = vrot.slane %v2151, %v2163
    %v2165 = vlaneseq
    %v2166 = vshrl.u32 %v2165, 7
    %v2167 = vsub.s32 3, %v2166
    %v2168 = vrot.slane %v2151, %v2167
    %v2169 = vlaneseq
    %v2170 = vshrl.u32 %v2169, 7
    %v2171 = vsub.s32 4, %v2170
    %v2172 = vrot.slane %v2151, %v2171
    %v2179 = vsel %vm700, %v2127, 0
    %2181 = vmatprep.subr.mxu0 %v2129
    %2182 = vmatpush1.msra.mxu0 %v2128
    %2183 = vmatprep.subr.mxu0 %v2134
    %2184 = vmatpush1.msra.mxu0 %v2133
    %2185 = vmatprep.subr.mxu0 %v2139
    %2186 = vmatpush1.msra.mxu0 %v2138
    %2187 = vmatprep.subr.mxu0 %v2144
    %2188 = vmatpush1.msra.mxu0 %v2143
    %2189 = vmatprep.subr.mxu0 0.0
    %2190 = vmatpush1.msra.mxu0 0.0
    %2191 = vmatprep.subr.mxu0 0.0
    %2192 = vmatpush1.msra.mxu0 0.0
    %2193 = vmatprep.subr.mxu0 0.0
    %2194 = vmatpush1.msra.mxu0 0.0
    %2195 = vmatprep.subr.mxu0 0.0
    %2196 = vmatpush1.msra.mxu0 0.0
    %2197 = vmatprep.subr.mxu0 0.0
    %2198 = vmatpush1.msra.mxu0 0.0
    %2199 = vmatprep.subr.mxu0 0.0
    %2200 = vmatpush1.msra.mxu0 0.0
    %2201 = vmatprep.subr.mxu0 0.0
    %2202 = vmatpush1.msra.mxu0 0.0
    %2203 = vmatprep.subr.mxu0 0.0
    %2204 = vmatpush1.msra.mxu0 0.0
    %2205 = vmatprep.subr.mxu0 0.0
    %2206 = vmatpush1.msra.mxu0 0.0
    %2207 = vmatprep.subr.mxu0 0.0
    %2208 = vmatpush1.msra.mxu0 0.0
    %2209 = vmatprep.subr.mxu0 0.0
    %2210 = vmatpush1.msra.mxu0 0.0
    %2211 = vmatprep.subr.mxu0 0.0
    %2212 = vmatpush1.msra.mxu0 0.0
    %2213 = vmatprep.subr.mxu0 0.0
    %2214 = vmatpush1.msra.mxu0 0.0
    %2215 = vmatprep.subr.mxu0 0.0
    %2216 = vmatpush1.msra.mxu0 0.0
    %2217 = vmatprep.subr.mxu0 0.0
    %2218 = vmatpush1.msra.mxu0 0.0
    %2219 = vmatprep.subr.mxu0 0.0
    %2220 = vmatpush1.msra.mxu0 0.0
    %2221 = vmatprep.subr.mxu0 0.0
    %2222 = vmatpush1.msra.mxu0 0.0
    %2223 = vmatprep.subr.mxu0 0.0
    %2224 = vmatpush1.msra.mxu0 0.0
    %2225 = vmatprep.subr.mxu0 0.0
    %2226 = vmatpush1.msra.mxu0 0.0
    %2227 = vmatprep.subr.mxu0 0.0
    %2228 = vmatpush1.msra.mxu0 0.0
    %2229 = vmatprep.subr.mxu0 0.0
    %2230 = vmatpush1.msra.mxu0 0.0
    %2231 = vmatprep.subr.mxu0 0.0
    %2232 = vmatpush1.msra.mxu0 0.0
    %2233 = vmatprep.subr.mxu0 0.0
    %2234 = vmatpush1.msra.mxu0 0.0
    %2235 = vmatprep.subr.mxu0 0.0
    %2236 = vmatpush1.msra.mxu0 0.0
    %2237 = vmatprep.subr.mxu0 0.0
    %2238 = vmatpush1.msra.mxu0 0.0
    %2239 = vmatprep.subr.mxu0 0.0
    %2240 = vmatpush1.msra.mxu0 0.0
    %2241 = vmatprep.subr.mxu0 0.0
    %2242 = vmatpush1.msra.mxu0 0.0
    %2243 = vmatprep.subr.mxu0 0.0
    %2244 = vmatpush1.msra.mxu0 0.0
    %2245 = vmatprep.mubr.f32.mxu0 0.0
    %2246 = vmatmul.mubr.f32.gmra.mrb[0].mxu0 %v2179
    %v2247 = vpop.f32.mrb[0].mxu0
    %v2248 = vadd.f32 %v2156, %v2247
    %v2249 = vpop.f32.mrb[0].mxu0
    %v2250 = vadd.f32 %v2160, %v2249
    %2251 = vdwg.mxu0
    %2252 = vmatprep.subr.mxu0 %v2131
    %2253 = vmatpush1.msra.mxu0 %v2130
    %2254 = vmatprep.subr.mxu0 %v2136
    %2255 = vmatpush1.msra.mxu0 %v2135
    %2256 = vmatprep.subr.mxu0 %v2141
    %2257 = vmatpush1.msra.mxu0 %v2140
    %2258 = vmatprep.subr.mxu0 %v2146
    %2259 = vmatpush1.msra.mxu0 %v2145
    %2260 = vmatprep.subr.mxu0 0.0
    %2261 = vmatpush1.msra.mxu0 0.0
    %2262 = vmatprep.subr.mxu0 0.0
    %2263 = vmatpush1.msra.mxu0 0.0
    %2264 = vmatprep.subr.mxu0 0.0
    %2265 = vmatpush1.msra.mxu0 0.0
    %2266 = vmatprep.subr.mxu0 0.0
    %2267 = vmatpush1.msra.mxu0 0.0
    %2268 = vmatprep.subr.mxu0 0.0
    %2269 = vmatpush1.msra.mxu0 0.0
    %2270 = vmatprep.subr.mxu0 0.0
    %2271 = vmatpush1.msra.mxu0 0.0
    %2272 = vmatprep.subr.mxu0 0.0
    %2273 = vmatpush1.msra.mxu0 0.0
    %2274 = vmatprep.subr.mxu0 0.0
    %2275 = vmatpush1.msra.mxu0 0.0
    %2276 = vmatprep.subr.mxu0 0.0
    %2277 = vmatpush1.msra.mxu0 0.0
    %2278 = vmatprep.subr.mxu0 0.0
    %2279 = vmatpush1.msra.mxu0 0.0
    %2280 = vmatprep.subr.mxu0 0.0
    %2281 = vmatpush1.msra.mxu0 0.0
    %2282 = vmatprep.subr.mxu0 0.0
    %2283 = vmatpush1.msra.mxu0 0.0
    %2284 = vmatprep.subr.mxu0 0.0
    %2285 = vmatpush1.msra.mxu0 0.0
    %2286 = vmatprep.subr.mxu0 0.0
    %2287 = vmatpush1.msra.mxu0 0.0
    %2288 = vmatprep.subr.mxu0 0.0
    %2289 = vmatpush1.msra.mxu0 0.0
    %2290 = vmatprep.subr.mxu0 0.0
    %2291 = vmatpush1.msra.mxu0 0.0
    %2292 = vmatprep.subr.mxu0 0.0
    %2293 = vmatpush1.msra.mxu0 0.0
    %2294 = vmatprep.subr.mxu0 0.0
    %2295 = vmatpush1.msra.mxu0 0.0
    %2296 = vmatprep.subr.mxu0 0.0
    %2297 = vmatpush1.msra.mxu0 0.0
    %2298 = vmatprep.subr.mxu0 0.0
    %2299 = vmatpush1.msra.mxu0 0.0
    %2300 = vmatprep.subr.mxu0 0.0
    %2301 = vmatpush1.msra.mxu0 0.0
    %2302 = vmatprep.subr.mxu0 0.0
    %2303 = vmatpush1.msra.mxu0 0.0
    %2304 = vmatprep.subr.mxu0 0.0
    %2305 = vmatpush1.msra.mxu0 0.0
    %2306 = vmatprep.subr.mxu0 0.0
    %2307 = vmatpush1.msra.mxu0 0.0
    %2308 = vmatprep.subr.mxu0 0.0
    %2309 = vmatpush1.msra.mxu0 0.0
    %2310 = vmatprep.subr.mxu0 0.0
    %2311 = vmatpush1.msra.mxu0 0.0
    %2312 = vmatprep.subr.mxu0 0.0
    %2313 = vmatpush1.msra.mxu0 0.0
    %2314 = vmatprep.subr.mxu0 0.0
    %2315 = vmatpush1.msra.mxu0 0.0
    %2316 = vmatprep.mubr.f32.mxu0 0.0
    %2317 = vmatmul.mubr.f32.gmra.mrb[0].mxu0 %v2179
    %v2318 = vpop.f32.mrb[0].mxu0
    %v2319 = vadd.f32 %v2164, %v2318
    %v2320 = vpop.f32.mrb[0].mxu0
    %v2321 = vadd.f32 %v2168, %v2320
    %2322 = vdwg.mxu0
    %2323 = vmatprep.subr.mxu0 0.0
    %2324 = vmatpush1.msra.mxu0 %v2132
    %2325 = vmatprep.subr.mxu0 0.0
    %2326 = vmatpush1.msra.mxu0 %v2137
    %2327 = vmatprep.subr.mxu0 0.0
    %2328 = vmatpush1.msra.mxu0 %v2142
    %2329 = vmatprep.subr.mxu0 0.0
    %2330 = vmatpush1.msra.mxu0 %v2147
    %2331 = vmatprep.subr.mxu0 0.0
    %2332 = vmatpush1.msra.mxu0 0.0
    %2333 = vmatprep.subr.mxu0 0.0
    %2334 = vmatpush1.msra.mxu0 0.0
    %2335 = vmatprep.subr.mxu0 0.0
    %2336 = vmatpush1.msra.mxu0 0.0
    %2337 = vmatprep.subr.mxu0 0.0
    %2338 = vmatpush1.msra.mxu0 0.0
    %2339 = vmatprep.subr.mxu0 0.0
    %2340 = vmatpush1.msra.mxu0 0.0
    %2341 = vmatprep.subr.mxu0 0.0
    %2342 = vmatpush1.msra.mxu0 0.0
    %2343 = vmatprep.subr.mxu0 0.0
    %2344 = vmatpush1.msra.mxu0 0.0
    %2345 = vmatprep.subr.mxu0 0.0
    %2346 = vmatpush1.msra.mxu0 0.0
    %2347 = vmatprep.subr.mxu0 0.0
    %2348 = vmatpush1.msra.mxu0 0.0
    %2349 = vmatprep.subr.mxu0 0.0
    %2350 = vmatpush1.msra.mxu0 0.0
    %2351 = vmatprep.subr.mxu0 0.0
    %2352 = vmatpush1.msra.mxu0 0.0
    %2353 = vmatprep.subr.mxu0 0.0
    %2354 = vmatpush1.msra.mxu0 0.0
    %2355 = vmatprep.subr.mxu0 0.0
    %2356 = vmatpush1.msra.mxu0 0.0
    %2357 = vmatprep.subr.mxu0 0.0
    %2358 = vmatpush1.msra.mxu0 0.0
    %2359 = vmatprep.subr.mxu0 0.0
    %2360 = vmatpush1.msra.mxu0 0.0
    %2361 = vmatprep.subr.mxu0 0.0
    %2362 = vmatpush1.msra.mxu0 0.0
    %2363 = vmatprep.subr.mxu0 0.0
    %2364 = vmatpush1.msra.mxu0 0.0
    %2365 = vmatprep.subr.mxu0 0.0
    %2366 = vmatpush1.msra.mxu0 0.0
    %2367 = vmatprep.subr.mxu0 0.0
    %2368 = vmatpush1.msra.mxu0 0.0
    %2369 = vmatprep.subr.mxu0 0.0
    %2370 = vmatpush1.msra.mxu0 0.0
    %2371 = vmatprep.subr.mxu0 0.0
    %2372 = vmatpush1.msra.mxu0 0.0
    %2373 = vmatprep.subr.mxu0 0.0
    %2374 = vmatpush1.msra.mxu0 0.0
    %2375 = vmatprep.subr.mxu0 0.0
    %2376 = vmatpush1.msra.mxu0 0.0
    %2377 = vmatprep.subr.mxu0 0.0
    %2378 = vmatpush1.msra.mxu0 0.0
    %2379 = vmatprep.subr.mxu0 0.0
    %2380 = vmatpush1.msra.mxu0 0.0
    %2381 = vmatprep.subr.mxu0 0.0
    %2382 = vmatpush1.msra.mxu0 0.0
    %2383 = vmatprep.subr.mxu0 0.0
    %2384 = vmatpush1.msra.mxu0 0.0
    %2385 = vmatprep.subr.mxu0 0.0
    %2386 = vmatpush1.msra.mxu0 0.0
    %2387 = vmatprep.mubr.f32.mxu0 0.0
    %2388 = vmatmul.mubr.f32.gmra.mrb[0].mxu0 %v2179
    %v2389 = vpop.f32.mrb[0].mxu0
    %v2390 = vadd.f32 %v2172, %v2389
    %v2391 = vpop.f32.mrb[0].mxu0
    %2392 = vdwg.mxu0
    %v2393 = vmax.f32 %v2248, %v2250
    %v2394 = vmax.f32 %v2393, %v2319
    %v2395 = vsub.f32 %v2248, %v2394
    %v2396 = vmul.f32 %v2395, 1.442695
    %v2397 = vpow.pop %v2396
    %v2398 = vsub.f32 %v2250, %v2394
    %v2399 = vmul.f32 %v2398, 1.442695
    %v2400 = vpow.pop %v2399
    %v2401 = vsub.f32 %v2319, %v2394
    %v2402 = vmul.f32 %v2401, 1.442695
    %v2403 = vpow.pop %v2402
    %v2404 = vadd.f32 %v2397, %v2400
    %v2405 = vadd.f32 %v2404, %v2403
    %v2406 = vmul.f32 %v2321, 0.5
    %v2407 = vtanh.pop %v2406
    %v2408 = vmul.f32 %v2407, 0.5
    %v2409 = vadd.f32 %v2408, 0.5
    %v2410 = vmul.f32 %v2397, %v2409
    %v2411 = vmul.f32 %v2390, 0.5
    %v2412 = vtanh.pop %v2411
    %v2413 = vmul.f32 %v2412, 0.5
    %v2414 = vadd.f32 %v2413, 0.5
    %v2415 = vmul.f32 %v2400, %v2414
    %v2416 = vadd.f32 %v2410, %v2415
    %v2417 = vrcp.pop %v2405
    %v2418 = vmul.f32 %v2416, %v2417
    %vm2419 = vcmask 123904
    %2420 = vst.msk [vmem:[#allocation2] sm:$0x3] %vm2419, %v2418
    // Predicated region
    $region38: #{netfv_model_forward.1} parent=1 // pred_check
      _
    $region39: #{netfv_model_forward.1} parent=1 // pred_check_branch
      %2422 = sbr.rel (0) target = $region41
    $region40: #{netfv_model_forward.1} parent=1 // pred_region
      %s2424 = ssub.s32 32, 32
      %2425 = vsyncadd [#allocation3], %s2424
      %s2427 = sshll.u32 [#allocation2], 4
      %s2428 = int_to_ptr.vmem [resolvable:$true] %s2427
      %2430 = dma.vmem_to_hbm [thread:$0]  %s2428, 32, %s9, [#allocation3]
    $region41: #{netfv_model_forward.1} parent=1 // pred_fallthru
      _
    // Predicated region
    $region42: #{netfv_model_forward.1} parent=1 // pred_check
      _
    $region43: #{netfv_model_forward.1} parent=1 // pred_check_branch
      %2432 = sbr.rel (0) target = $region45
    $region44: #{netfv_model_forward.1} parent=1 // pred_region
      %2433 = dma.done [#allocation3], 32
    $region45: #{netfv_model_forward.1} parent=1 // pred_fallthru
      _
    %2434 = vsyncpa [#allocation3], 1

</llo_original>
